<compile_context>
chip_gen: v6e
topology: v6e:2x2x1
jax: 0.10.0
libtpu: 0.0.40
codegen_flags: <defaults>
</compile_context>

<pallas_src>
import jax
import jax.numpy as jnp
from jax import lax
from jax.experimental import pallas as pl
from jax.experimental.pallas import tpu as pltpu

HIDDEN = 32
NUM_CONVS = 2
SHORT_CUT = True
SIGMA = 25.0
FOURIER_SCALE = 30.0
GIN_EPS = 0.0

_VMEM = pl.BlockSpec(memory_space=pltpu.MemorySpace.VMEM)


def _relu(x):
    return jnp.maximum(x, 0.0)


def _mm(a, b):
    return jnp.dot(a, b, preferred_element_type=jnp.float32)


# ---------------------------------------------------------------------------
# Single fused kernel: t-embed -> edge input MLP -> 2x GINEConv -> output MLP
# ---------------------------------------------------------------------------
def fused_scorenet_kernel(
    atom_ref, bond_ref, d_ref, t_ref,
    src_ref, dst_ref, dstr_ref, e2g_ref,
    fw_ref, lwa_ref, lwb_ref, lb_ref, d1w_ref, d1b_ref,
    inw1_ref, inb1_ref, inw2_ref, inb2_ref,
    gw1_ref, gb1_ref, gw2_ref, gb2_ref,
    ow1a_ref, ow1b_ref, ob1_ref, ow2_ref, ob2_ref, ow3_ref, ob3_ref,
    out_ref,
):
    N = atom_ref.shape[0]
    E = bond_ref.shape[0]
    G = t_ref.shape[0]

    # --- time embedding (per graph): Fourier -> Linear -> dense1 ----------
    t = t_ref[...]                                              # (G, 1)
    proj = _mm(t, fw_ref[...]) * (2.0 * jnp.pi)                 # (G, H/2)
    # Split-weight form of Linear([sin, cos]) -- avoids a lane-dim concat.
    h_t = (_mm(jnp.sin(proj), lwa_ref[...])
           + _mm(jnp.cos(proj), lwb_ref[...]) + lb_ref[...])    # (G, H)
    t_emb = _mm(h_t, d1w_ref[...]) + d1b_ref[...]               # (G, 1)

    # marginal_prob_std(t) per graph (G exp/sqrt instead of E).
    log_sigma = jnp.log(SIGMA)
    std_g = jnp.sqrt((jnp.exp(2.0 * t * log_sigma) - 1.0) / (2.0 * log_sigma))

    # --- gather / scatter operators built in-kernel (no HBM one-hots) -----
    iota_en = lax.broadcasted_iota(jnp.int32, (E, N), 1)
    gsrc = (src_ref[...] == iota_en).astype(jnp.float32)        # (E, N) gather src
    gdst = (dst_ref[...] == iota_en).astype(jnp.float32)        # (E, N) gather dst
    sdst = (dstr_ref[...] ==
            lax.broadcasted_iota(jnp.int32, (N, E), 0)).astype(jnp.float32)  # (N, E)
    ge2g = (e2g_ref[...] ==
            lax.broadcasted_iota(jnp.int32, (E, G), 1)).astype(jnp.float32)  # (E, G)

    # --- edge feature: input_mlp(d) + t_emb[edge2graph], * bond embedding -
    de = _relu(_mm(d_ref[...], inw1_ref[...]) + inb1_ref[...])  # (E, H)
    de = _mm(de, inw2_ref[...]) + inb2_ref[...]                 # (E, H)
    de = de + _mm(ge2g, t_emb)                                  # (E, 1) bcast
    bond_attr = de * bond_ref[...]                              # (E, H)

    # --- GraphIsomorphismNetwork: NUM_CONVS x GINEConv --------------------
    x = atom_ref[...]                                           # (N, H)
    for i in range(NUM_CONVS):
        x_src = _mm(gsrc, x)                                    # (E, H)
        msg = _relu(x_src + bond_attr)                          # (E, H)
        agg = _mm(sdst, msg)                                    # (N, H) scatter-add
        z = agg + (1.0 + GIN_EPS) * x
        h = _relu(_mm(z, gw1_ref[i]) + gb1_ref[i])
        h = _mm(h, gw2_ref[i]) + gb2_ref[i]
        if i < NUM_CONVS - 1:
            h = _relu(h)
        if SHORT_CUT:
            h = h + x
        x = h                                                   # (N, H)

    # --- output MLP on [h_row*h_col, bond_attr] (split weight, no concat) -
    h_row = _mm(gsrc, x)                                        # (E, H)
    h_col = _mm(gdst, x)                                        # (E, H)
    o = _relu(_mm(h_row * h_col, ow1a_ref[...])
              + _mm(bond_attr, ow1b_ref[...]) + ob1_ref[...])   # (E, H)
    o = _relu(_mm(o, ow2_ref[...]) + ob2_ref[...])              # (E, H/2)
    s = _mm(o, ow3_ref[...]) + ob3_ref[...]                     # (E, 1)

    out_ref[...] = s / _mm(ge2g, std_g)                         # / marginal_prob_std


# ---------------------------------------------------------------------------
# Parameter init (deterministic, synthetic — no checkpoint loading)
# ---------------------------------------------------------------------------
def init_params(key, hidden=HIDDEN):
    ks = jax.random.split(key, 24)

    def dense(k, fi, fo):
        return jax.random.normal(k, (fi, fo), jnp.float32) / jnp.sqrt(float(fi))

    p = {}
    p["atom_emb"] = jax.random.normal(ks[0], (100, hidden), jnp.float32) * 0.1
    p["bond_emb"] = jax.random.normal(ks[1], (100, hidden), jnp.float32) * 0.1
    # GaussianFourierProjection fixed weights (embed_dim//2,), scale=30
    p["fourier_w"] = jax.random.normal(ks[2], (1, hidden // 2), jnp.float32) * FOURIER_SCALE
    p["t_lin_w"] = dense(ks[3], hidden, hidden)
    p["t_lin_b"] = jnp.zeros((1, hidden), jnp.float32)
    p["d1_w"] = dense(ks[4], hidden, 1)
    p["d1_b"] = jnp.zeros((1, 1), jnp.float32)
    # input_mlp: 1 -> H -> H
    p["in_w1"] = dense(ks[5], 1, hidden)
    p["in_b1"] = jnp.zeros((1, hidden), jnp.float32)
    p["in_w2"] = dense(ks[6], hidden, hidden)
    p["in_b2"] = jnp.zeros((1, hidden), jnp.float32)
    # GIN conv MLPs: H -> H -> H, stacked over convs
    p["gin_w1"] = jnp.stack([dense(ks[7 + 2 * i], hidden, hidden) for i in range(NUM_CONVS)])
    p["gin_b1"] = jnp.zeros((NUM_CONVS, 1, hidden), jnp.float32)
    p["gin_w2"] = jnp.stack([dense(ks[8 + 2 * i], hidden, hidden) for i in range(NUM_CONVS)])
    p["gin_b2"] = jnp.zeros((NUM_CONVS, 1, hidden), jnp.float32)
    # output_mlp: 2H -> H -> H/2 -> 1
    p["out_w1"] = dense(ks[15], 2 * hidden, hidden)
    p["out_b1"] = jnp.zeros((1, hidden), jnp.float32)
    p["out_w2"] = dense(ks[16], hidden, hidden // 2)
    p["out_b2"] = jnp.zeros((1, hidden // 2), jnp.float32)
    p["out_w3"] = dense(ks[17], hidden // 2, 1)
    p["out_b3"] = jnp.zeros((1, 1), jnp.float32)
    return p


# ---------------------------------------------------------------------------
# Forward pass: embedding-table lookups as XLA glue, everything else fused.
# ---------------------------------------------------------------------------
def scorenet_forward(params, node_type, edge_type, edge_index, edge_length, batch, t):
    E = edge_index.shape[1]
    G = t.shape[0]
    H = HIDDEN
    f32 = jnp.float32

    src, dst = edge_index[0], edge_index[1]
    edge2graph = batch[src]                                    # (E,)

    # Embedding-table lookups stay as XLA glue gathers (tables live in HBM).
    atom_attr = params["atom_emb"][node_type].astype(f32)      # (N, H)
    bond_emb = params["bond_emb"][edge_type].astype(f32)       # (E, H)

    # Tiny int32 index vectors — one-hot operators are built inside the kernel.
    src_col = src.reshape(E, 1).astype(jnp.int32)
    dst_col = dst.reshape(E, 1).astype(jnp.int32)
    dst_row = dst.reshape(1, E).astype(jnp.int32)
    e2g_col = edge2graph.reshape(E, 1).astype(jnp.int32)

    # Split weights so the kernel avoids lane-dim concatenations.
    lwa = params["t_lin_w"][: H // 2]        # multiplies sin(proj)
    lwb = params["t_lin_w"][H // 2:]         # multiplies cos(proj)
    ow1a = params["out_w1"][:H]              # multiplies h_row * h_col
    ow1b = params["out_w1"][H:]              # multiplies bond_attr

    # TODO(synk): for graphs whose (E,H)/(N,H)/(E,N) working set exceeds VMEM
    # (esp. v7x's 64 MiB), tile E (and N) with a grid + PrefetchScalarGridSpec
    # and a segment-sum scatter instead of the whole-graph residency used here.
    scores = pl.pallas_call(
        fused_scorenet_kernel,
        out_shape=jax.ShapeDtypeStruct((E, 1), f32),
        in_specs=[_VMEM] * 29,
        out_specs=_VMEM,
        compiler_params=pltpu.CompilerParams(vmem_limit_bytes=32 * 1024 * 1024),
    )(
        atom_attr, bond_emb, edge_length.astype(f32), t.reshape(G, 1).astype(f32),
        src_col, dst_col, dst_row, e2g_col,
        params["fourier_w"], lwa, lwb, params["t_lin_b"], params["d1_w"], params["d1_b"],
        params["in_w1"], params["in_b1"], params["in_w2"], params["in_b2"],
        params["gin_w1"], params["gin_b1"], params["gin_w2"], params["gin_b2"],
        ow1a, ow1b, params["out_b1"], params["out_w2"], params["out_b2"],
        params["out_w3"], params["out_b3"],
    )
    return scores.reshape(-1)                                  # (E,)


if __name__ == "__main__":
    key = jax.random.PRNGKey(0)
    pkey, dkey = jax.random.split(key)
    params = init_params(pkey)

    # Small synthetic graph batch: 2 graphs, 8 nodes total, 16 edges.
    N, E, G = 8, 16, 2
    ks = jax.random.split(dkey, 5)
    node_type = jax.random.randint(ks[0], (N,), 0, 100, dtype=jnp.int32)
    edge_type = jax.random.randint(ks[1], (E,), 0, 100, dtype=jnp.int32)
    # first 8 edges within graph 0 (nodes 0..3), last 8 within graph 1 (nodes 4..7)
    src0 = jax.random.randint(ks[2], (E,), 0, 4, dtype=jnp.int32)
    dst0 = jax.random.randint(ks[3], (E,), 0, 4, dtype=jnp.int32)
    offset = jnp.where(jnp.arange(E) < E // 2, 0, 4).astype(jnp.int32)
    edge_index = jnp.stack([src0 + offset, dst0 + offset], axis=0)        # (2, E)
    edge_length = jax.random.uniform(ks[4], (E, 1), jnp.float32, 0.5, 3.0)
    batch = jnp.array([0, 0, 0, 0, 1, 1, 1, 1], dtype=jnp.int32)          # (N,)
    t = jnp.array([0.3, 0.7], dtype=jnp.float32)                          # (G,)

    scores = scorenet_forward(params, node_type, edge_type, edge_index,
                              edge_length, batch, t)
    jax.block_until_ready(scores)
    assert scores.shape == (E,) and scores.dtype == jnp.float32
    assert bool(jnp.all(jnp.isfinite(scores)))
    print("KERNEL_OK")
</pallas_src>

<mosaic_0001>
module attributes {stable_mosaic.version = 11 : i64} {
  func.func @fused_scorenet_kernel(%arg0: memref<8x32xf32, #tpu.memory_space<vmem>>, %arg1: memref<16x32xf32, #tpu.memory_space<vmem>>, %arg2: memref<16x1xf32, #tpu.memory_space<vmem>>, %arg3: memref<2x1xf32, #tpu.memory_space<vmem>>, %arg4: memref<16x1xi32, #tpu.memory_space<vmem>>, %arg5: memref<16x1xi32, #tpu.memory_space<vmem>>, %arg6: memref<1x16xi32, #tpu.memory_space<vmem>>, %arg7: memref<16x1xi32, #tpu.memory_space<vmem>>, %arg8: memref<1x16xf32, #tpu.memory_space<vmem>>, %arg9: memref<16x32xf32, #tpu.memory_space<vmem>>, %arg10: memref<16x32xf32, #tpu.memory_space<vmem>>, %arg11: memref<1x32xf32, #tpu.memory_space<vmem>>, %arg12: memref<32x1xf32, #tpu.memory_space<vmem>>, %arg13: memref<1x1xf32, #tpu.memory_space<vmem>>, %arg14: memref<1x32xf32, #tpu.memory_space<vmem>>, %arg15: memref<1x32xf32, #tpu.memory_space<vmem>>, %arg16: memref<32x32xf32, #tpu.memory_space<vmem>>, %arg17: memref<1x32xf32, #tpu.memory_space<vmem>>, %arg18: memref<2x32x32xf32, #tpu.memory_space<vmem>>, %arg19: memref<2x1x32xf32, #tpu.memory_space<vmem>>, %arg20: memref<2x32x32xf32, #tpu.memory_space<vmem>>, %arg21: memref<2x1x32xf32, #tpu.memory_space<vmem>>, %arg22: memref<32x32xf32, #tpu.memory_space<vmem>>, %arg23: memref<32x32xf32, #tpu.memory_space<vmem>>, %arg24: memref<1x32xf32, #tpu.memory_space<vmem>>, %arg25: memref<32x16xf32, #tpu.memory_space<vmem>>, %arg26: memref<1x16xf32, #tpu.memory_space<vmem>>, %arg27: memref<16x1xf32, #tpu.memory_space<vmem>>, %arg28: memref<1x1xf32, #tpu.memory_space<vmem>>, %arg29: memref<16x1xf32, #tpu.memory_space<vmem>>) attributes {dimension_semantics = [], scalar_prefetch = 0 : i64, scratch_operands = 0 : i64, tpu.core_type = #tpu.core_type<tc>} {
    %c0 = arith.constant 0 : index
    %c0_0 = arith.constant 0 : index
    %0 = vector.load %arg3[%c0, %c0_0] : memref<2x1xf32, #tpu.memory_space<vmem>>, vector<2x1xf32>
    %c0_1 = arith.constant 0 : index
    %c0_2 = arith.constant 0 : index
    %1 = vector.load %arg8[%c0_1, %c0_2] : memref<1x16xf32, #tpu.memory_space<vmem>>, vector<1x16xf32>
    %cst = arith.constant dense<0.000000e+00> : vector<2x16xf32>
    %2 = tpu.matmul %0, %1, %cst {dimension_numbers = #tpu.dot_dimension_numbers<[1], [0], [0], [1], [0, 0, 1, 1], [], []>} : vector<2x1xf32>, vector<1x16xf32>, vector<2x16xf32> -> vector<2x16xf32>
    %cst_3 = arith.constant 6.28318548 : f32
    %3 = vector.broadcast %cst_3 : f32 to vector<2x16xf32>
    %4 = arith.mulf %2, %3 : vector<2x16xf32>
    %5 = math.sin %4 : vector<2x16xf32>
    %c0_4 = arith.constant 0 : index
    %c0_5 = arith.constant 0 : index
    %6 = vector.load %arg9[%c0_4, %c0_5] : memref<16x32xf32, #tpu.memory_space<vmem>>, vector<16x32xf32>
    %cst_6 = arith.constant dense<0.000000e+00> : vector<2x32xf32>
    %7 = tpu.matmul %5, %6, %cst_6 {dimension_numbers = #tpu.dot_dimension_numbers<[1], [0], [0], [1], [0, 0, 1, 1], [], []>} : vector<2x16xf32>, vector<16x32xf32>, vector<2x32xf32> -> vector<2x32xf32>
    %8 = math.cos %4 : vector<2x16xf32>
    %c0_7 = arith.constant 0 : index
    %c0_8 = arith.constant 0 : index
    %9 = vector.load %arg10[%c0_7, %c0_8] : memref<16x32xf32, #tpu.memory_space<vmem>>, vector<16x32xf32>
    %cst_9 = arith.constant dense<0.000000e+00> : vector<2x32xf32>
    %10 = tpu.matmul %8, %9, %cst_9 {dimension_numbers = #tpu.dot_dimension_numbers<[1], [0], [0], [1], [0, 0, 1, 1], [], []>} : vector<2x16xf32>, vector<16x32xf32>, vector<2x32xf32> -> vector<2x32xf32>
    %11 = arith.addf %7, %10 : vector<2x32xf32>
    %c0_10 = arith.constant 0 : index
    %c0_11 = arith.constant 0 : index
    %12 = vector.load %arg11[%c0_10, %c0_11] : memref<1x32xf32, #tpu.memory_space<vmem>>, vector<1x32xf32>
    %13 = vector.broadcast %12 : vector<1x32xf32> to vector<2x32xf32>
    %14 = arith.addf %11, %13 : vector<2x32xf32>
    %c0_12 = arith.constant 0 : index
    %c0_13 = arith.constant 0 : index
    %15 = vector.load %arg12[%c0_12, %c0_13] : memref<32x1xf32, #tpu.memory_space<vmem>>, vector<32x1xf32>
    %cst_14 = arith.constant dense<0.000000e+00> : vector<2x1xf32>
    %16 = tpu.matmul %14, %15, %cst_14 {dimension_numbers = #tpu.dot_dimension_numbers<[1], [0], [0], [1], [0, 0, 1, 1], [], []>} : vector<2x32xf32>, vector<32x1xf32>, vector<2x1xf32> -> vector<2x1xf32>
    %c0_15 = arith.constant 0 : index
    %c0_16 = arith.constant 0 : index
    %17 = vector.load %arg13[%c0_15, %c0_16] : memref<1x1xf32, #tpu.memory_space<vmem>>, vector<1x1xf32>
    %18 = vector.broadcast %17 : vector<1x1xf32> to vector<2x1xf32>
    %19 = arith.addf %16, %18 : vector<2x1xf32>
    %cst_17 = arith.constant 2.500000e+01 : f32
    %20 = math.log %cst_17 : f32
    %cst_18 = arith.constant 2.000000e+00 : f32
    %21 = vector.broadcast %cst_18 : f32 to vector<2x1xf32>
    %22 = arith.mulf %21, %0 : vector<2x1xf32>
    %23 = vector.broadcast %20 : f32 to vector<2x1xf32>
    %24 = arith.mulf %22, %23 : vector<2x1xf32>
    %25 = math.exp %24 : vector<2x1xf32>
    %cst_19 = arith.constant 1.000000e+00 : f32
    %26 = vector.broadcast %cst_19 : f32 to vector<2x1xf32>
    %27 = arith.subf %25, %26 : vector<2x1xf32>
    %cst_20 = arith.constant 2.000000e+00 : f32
    %28 = arith.mulf %cst_20, %20 : f32
    %29 = vector.broadcast %28 : f32 to vector<2x1xf32>
    %30 = arith.divf %27, %29 : vector<2x1xf32>
    %31 = math.sqrt %30 : vector<2x1xf32>
    %32 = tpu.iota {dimensions = array<i32: 1>} : vector<16x8xi32>
    %c0_21 = arith.constant 0 : index
    %c0_22 = arith.constant 0 : index
    %33 = vector.load %arg4[%c0_21, %c0_22] : memref<16x1xi32, #tpu.memory_space<vmem>>, vector<16x1xi32>
    %34 = vector.broadcast %33 : vector<16x1xi32> to vector<16x8xi32>
    %35 = arith.cmpi eq, %34, %32 : vector<16x8xi32>
    %36 = arith.extui %35 : vector<16x8xi1> to vector<16x8xi32>
    %37 = arith.sitofp %36 : vector<16x8xi32> to vector<16x8xf32>
    %c0_23 = arith.constant 0 : index
    %c0_24 = arith.constant 0 : index
    %38 = vector.load %arg5[%c0_23, %c0_24] : memref<16x1xi32, #tpu.memory_space<vmem>>, vector<16x1xi32>
    %39 = vector.broadcast %38 : vector<16x1xi32> to vector<16x8xi32>
    %40 = arith.cmpi eq, %39, %32 : vector<16x8xi32>
    %41 = arith.extui %40 : vector<16x8xi1> to vector<16x8xi32>
    %42 = arith.sitofp %41 : vector<16x8xi32> to vector<16x8xf32>
    %c0_25 = arith.constant 0 : index
    %c0_26 = arith.constant 0 : index
    %43 = vector.load %arg6[%c0_25, %c0_26] : memref<1x16xi32, #tpu.memory_space<vmem>>, vector<1x16xi32>
    %44 = tpu.iota {dimensions = array<i32: 0>} : vector<8x16xi32>
    %45 = vector.broadcast %43 : vector<1x16xi32> to vector<8x16xi32>
    %46 = arith.cmpi eq, %45, %44 : vector<8x16xi32>
    %47 = arith.extui %46 : vector<8x16xi1> to vector<8x16xi32>
    %48 = arith.sitofp %47 : vector<8x16xi32> to vector<8x16xf32>
    %c0_27 = arith.constant 0 : index
    %c0_28 = arith.constant 0 : index
    %49 = vector.load %arg7[%c0_27, %c0_28] : memref<16x1xi32, #tpu.memory_space<vmem>>, vector<16x1xi32>
    %50 = tpu.iota {dimensions = array<i32: 1>} : vector<16x2xi32>
    %51 = vector.broadcast %49 : vector<16x1xi32> to vector<16x2xi32>
    %52 = arith.cmpi eq, %51, %50 : vector<16x2xi32>
    %53 = arith.extui %52 : vector<16x2xi1> to vector<16x2xi32>
    %54 = arith.sitofp %53 : vector<16x2xi32> to vector<16x2xf32>
    %c0_29 = arith.constant 0 : index
    %c0_30 = arith.constant 0 : index
    %55 = vector.load %arg2[%c0_29, %c0_30] : memref<16x1xf32, #tpu.memory_space<vmem>>, vector<16x1xf32>
    %c0_31 = arith.constant 0 : index
    %c0_32 = arith.constant 0 : index
    %56 = vector.load %arg14[%c0_31, %c0_32] : memref<1x32xf32, #tpu.memory_space<vmem>>, vector<1x32xf32>
    %cst_33 = arith.constant dense<0.000000e+00> : vector<16x32xf32>
    %57 = tpu.matmul %55, %56, %cst_33 {dimension_numbers = #tpu.dot_dimension_numbers<[1], [0], [0], [1], [0, 0, 1, 1], [], []>} : vector<16x1xf32>, vector<1x32xf32>, vector<16x32xf32> -> vector<16x32xf32>
    %c0_34 = arith.constant 0 : index
    %c0_35 = arith.constant 0 : index
    %58 = vector.load %arg15[%c0_34, %c0_35] : memref<1x32xf32, #tpu.memory_space<vmem>>, vector<1x32xf32>
    %59 = vector.broadcast %58 : vector<1x32xf32> to vector<16x32xf32>
    %60 = arith.addf %57, %59 : vector<16x32xf32>
    %cst_36 = arith.constant 0.000000e+00 : f32
    %61 = vector.broadcast %cst_36 : f32 to vector<16x32xf32>
    %62 = arith.maximumf %60, %61 : vector<16x32xf32>
    %c0_37 = arith.constant 0 : index
    %c0_38 = arith.constant 0 : index
    %63 = vector.load %arg16[%c0_37, %c0_38] : memref<32x32xf32, #tpu.memory_space<vmem>>, vector<32x32xf32>
    %cst_39 = arith.constant dense<0.000000e+00> : vector<16x32xf32>
    %64 = tpu.matmul %62, %63, %cst_39 {dimension_numbers = #tpu.dot_dimension_numbers<[1], [0], [0], [1], [0, 0, 1, 1], [], []>} : vector<16x32xf32>, vector<32x32xf32>, vector<16x32xf32> -> vector<16x32xf32>
    %c0_40 = arith.constant 0 : index
    %c0_41 = arith.constant 0 : index
    %65 = vector.load %arg17[%c0_40, %c0_41] : memref<1x32xf32, #tpu.memory_space<vmem>>, vector<1x32xf32>
    %66 = vector.broadcast %65 : vector<1x32xf32> to vector<16x32xf32>
    %67 = arith.addf %64, %66 : vector<16x32xf32>
    %cst_42 = arith.constant dense<0.000000e+00> : vector<16x1xf32>
    %68 = tpu.matmul %54, %19, %cst_42 {dimension_numbers = #tpu.dot_dimension_numbers<[1], [0], [0], [1], [0, 0, 1, 1], [], []>} : vector<16x2xf32>, vector<2x1xf32>, vector<16x1xf32> -> vector<16x1xf32>
    %69 = vector.broadcast %68 : vector<16x1xf32> to vector<16x32xf32>
    %70 = arith.addf %67, %69 : vector<16x32xf32>
    %c0_43 = arith.constant 0 : index
    %c0_44 = arith.constant 0 : index
    %71 = vector.load %arg1[%c0_43, %c0_44] : memref<16x32xf32, #tpu.memory_space<vmem>>, vector<16x32xf32>
    %72 = arith.mulf %70, %71 : vector<16x32xf32>
    %c0_45 = arith.constant 0 : index
    %c0_46 = arith.constant 0 : index
    %73 = vector.load %arg0[%c0_45, %c0_46] : memref<8x32xf32, #tpu.memory_space<vmem>>, vector<8x32xf32>
    %cst_47 = arith.constant dense<0.000000e+00> : vector<16x32xf32>
    %74 = tpu.matmul %37, %73, %cst_47 {dimension_numbers = #tpu.dot_dimension_numbers<[1], [0], [0], [1], [0, 0, 1, 1], [], []>} : vector<16x8xf32>, vector<8x32xf32>, vector<16x32xf32> -> vector<16x32xf32>
    %75 = arith.addf %74, %72 : vector<16x32xf32>
    %cst_48 = arith.constant 0.000000e+00 : f32
    %76 = vector.broadcast %cst_48 : f32 to vector<16x32xf32>
    %77 = arith.maximumf %75, %76 : vector<16x32xf32>
    %cst_49 = arith.constant dense<0.000000e+00> : vector<8x32xf32>
    %78 = tpu.matmul %48, %77, %cst_49 {dimension_numbers = #tpu.dot_dimension_numbers<[1], [0], [0], [1], [0, 0, 1, 1], [], []>} : vector<8x16xf32>, vector<16x32xf32>, vector<8x32xf32> -> vector<8x32xf32>
    %cst_50 = arith.constant 1.000000e+00 : f32
    %79 = vector.broadcast %cst_50 : f32 to vector<8x32xf32>
    %80 = arith.mulf %79, %73 : vector<8x32xf32>
    %81 = arith.addf %78, %80 : vector<8x32xf32>
    %c0_51 = arith.constant 0 : index
    %c0_52 = arith.constant 0 : index
    %c0_53 = arith.constant 0 : index
    %82 = vector.load %arg18[%c0_51, %c0_52, %c0_53] : memref<2x32x32xf32, #tpu.memory_space<vmem>>, vector<1x32x32xf32>
    %83 = vector.shape_cast %82 : vector<1x32x32xf32> to vector<32x32xf32>
    %cst_54 = arith.constant dense<0.000000e+00> : vector<8x32xf32>
    %84 = tpu.matmul %81, %83, %cst_54 {dimension_numbers = #tpu.dot_dimension_numbers<[1], [0], [0], [1], [0, 0, 1, 1], [], []>} : vector<8x32xf32>, vector<32x32xf32>, vector<8x32xf32> -> vector<8x32xf32>
    %c0_55 = arith.constant 0 : index
    %c0_56 = arith.constant 0 : index
    %c0_57 = arith.constant 0 : index
    %85 = vector.load %arg19[%c0_55, %c0_56, %c0_57] : memref<2x1x32xf32, #tpu.memory_space<vmem>>, vector<1x1x32xf32>
    %86 = vector.shape_cast %85 : vector<1x1x32xf32> to vector<1x32xf32>
    %87 = vector.broadcast %86 : vector<1x32xf32> to vector<8x32xf32>
    %88 = arith.addf %84, %87 : vector<8x32xf32>
    %cst_58 = arith.constant 0.000000e+00 : f32
    %89 = vector.broadcast %cst_58 : f32 to vector<8x32xf32>
    %90 = arith.maximumf %88, %89 : vector<8x32xf32>
    %c0_59 = arith.constant 0 : index
    %c0_60 = arith.constant 0 : index
    %c0_61 = arith.constant 0 : index
    %91 = vector.load %arg20[%c0_59, %c0_60, %c0_61] : memref<2x32x32xf32, #tpu.memory_space<vmem>>, vector<1x32x32xf32>
    %92 = vector.shape_cast %91 : vector<1x32x32xf32> to vector<32x32xf32>
    %cst_62 = arith.constant dense<0.000000e+00> : vector<8x32xf32>
    %93 = tpu.matmul %90, %92, %cst_62 {dimension_numbers = #tpu.dot_dimension_numbers<[1], [0], [0], [1], [0, 0, 1, 1], [], []>} : vector<8x32xf32>, vector<32x32xf32>, vector<8x32xf32> -> vector<8x32xf32>
    %c0_63 = arith.constant 0 : index
    %c0_64 = arith.constant 0 : index
    %c0_65 = arith.constant 0 : index
    %94 = vector.load %arg21[%c0_63, %c0_64, %c0_65] : memref<2x1x32xf32, #tpu.memory_space<vmem>>, vector<1x1x32xf32>
    %95 = vector.shape_cast %94 : vector<1x1x32xf32> to vector<1x32xf32>
    %96 = vector.broadcast %95 : vector<1x32xf32> to vector<8x32xf32>
    %97 = arith.addf %93, %96 : vector<8x32xf32>
    %cst_66 = arith.constant 0.000000e+00 : f32
    %98 = vector.broadcast %cst_66 : f32 to vector<8x32xf32>
    %99 = arith.maximumf %97, %98 : vector<8x32xf32>
    %100 = arith.addf %99, %73 : vector<8x32xf32>
    %cst_67 = arith.constant dense<0.000000e+00> : vector<16x32xf32>
    %101 = tpu.matmul %37, %100, %cst_67 {dimension_numbers = #tpu.dot_dimension_numbers<[1], [0], [0], [1], [0, 0, 1, 1], [], []>} : vector<16x8xf32>, vector<8x32xf32>, vector<16x32xf32> -> vector<16x32xf32>
    %102 = arith.addf %101, %72 : vector<16x32xf32>
    %cst_68 = arith.constant 0.000000e+00 : f32
    %103 = vector.broadcast %cst_68 : f32 to vector<16x32xf32>
    %104 = arith.maximumf %102, %103 : vector<16x32xf32>
    %cst_69 = arith.constant dense<0.000000e+00> : vector<8x32xf32>
    %105 = tpu.matmul %48, %104, %cst_69 {dimension_numbers = #tpu.dot_dimension_numbers<[1], [0], [0], [1], [0, 0, 1, 1], [], []>} : vector<8x16xf32>, vector<16x32xf32>, vector<8x32xf32> -> vector<8x32xf32>
    %cst_70 = arith.constant 1.000000e+00 : f32
    %106 = vector.broadcast %cst_70 : f32 to vector<8x32xf32>
    %107 = arith.mulf %106, %100 : vector<8x32xf32>
    %108 = arith.addf %105, %107 : vector<8x32xf32>
    %c1 = arith.constant 1 : index
    %c0_71 = arith.constant 0 : index
    %c0_72 = arith.constant 0 : index
    %109 = vector.load %arg18[%c1, %c0_71, %c0_72] : memref<2x32x32xf32, #tpu.memory_space<vmem>>, vector<1x32x32xf32>
    %110 = vector.shape_cast %109 : vector<1x32x32xf32> to vector<32x32xf32>
    %cst_73 = arith.constant dense<0.000000e+00> : vector<8x32xf32>
    %111 = tpu.matmul %108, %110, %cst_73 {dimension_numbers = #tpu.dot_dimension_numbers<[1], [0], [0], [1], [0, 0, 1, 1], [], []>} : vector<8x32xf32>, vector<32x32xf32>, vector<8x32xf32> -> vector<8x32xf32>
    %c1_74 = arith.constant 1 : index
    %c0_75 = arith.constant 0 : index
    %c0_76 = arith.constant 0 : index
    %112 = vector.load %arg19[%c1_74, %c0_75, %c0_76] : memref<2x1x32xf32, #tpu.memory_space<vmem>>, vector<1x1x32xf32>
    %113 = vector.shape_cast %112 : vector<1x1x32xf32> to vector<1x32xf32>
    %114 = vector.broadcast %113 : vector<1x32xf32> to vector<8x32xf32>
    %115 = arith.addf %111, %114 : vector<8x32xf32>
    %cst_77 = arith.constant 0.000000e+00 : f32
    %116 = vector.broadcast %cst_77 : f32 to vector<8x32xf32>
    %117 = arith.maximumf %115, %116 : vector<8x32xf32>
    %c1_78 = arith.constant 1 : index
    %c0_79 = arith.constant 0 : index
    %c0_80 = arith.constant 0 : index
    %118 = vector.load %arg20[%c1_78, %c0_79, %c0_80] : memref<2x32x32xf32, #tpu.memory_space<vmem>>, vector<1x32x32xf32>
    %119 = vector.shape_cast %118 : vector<1x32x32xf32> to vector<32x32xf32>
    %cst_81 = arith.constant dense<0.000000e+00> : vector<8x32xf32>
    %120 = tpu.matmul %117, %119, %cst_81 {dimension_numbers = #tpu.dot_dimension_numbers<[1], [0], [0], [1], [0, 0, 1, 1], [], []>} : vector<8x32xf32>, vector<32x32xf32>, vector<8x32xf32> -> vector<8x32xf32>
    %c1_82 = arith.constant 1 : index
    %c0_83 = arith.constant 0 : index
    %c0_84 = arith.constant 0 : index
    %121 = vector.load %arg21[%c1_82, %c0_83, %c0_84] : memref<2x1x32xf32, #tpu.memory_space<vmem>>, vector<1x1x32xf32>
    %122 = vector.shape_cast %121 : vector<1x1x32xf32> to vector<1x32xf32>
    %123 = vector.broadcast %122 : vector<1x32xf32> to vector<8x32xf32>
    %124 = arith.addf %120, %123 : vector<8x32xf32>
    %125 = arith.addf %124, %100 : vector<8x32xf32>
    %cst_85 = arith.constant dense<0.000000e+00> : vector<16x32xf32>
    %126 = tpu.matmul %37, %125, %cst_85 {dimension_numbers = #tpu.dot_dimension_numbers<[1], [0], [0], [1], [0, 0, 1, 1], [], []>} : vector<16x8xf32>, vector<8x32xf32>, vector<16x32xf32> -> vector<16x32xf32>
    %cst_86 = arith.constant dense<0.000000e+00> : vector<16x32xf32>
    %127 = tpu.matmul %42, %125, %cst_86 {dimension_numbers = #tpu.dot_dimension_numbers<[1], [0], [0], [1], [0, 0, 1, 1], [], []>} : vector<16x8xf32>, vector<8x32xf32>, vector<16x32xf32> -> vector<16x32xf32>
    %128 = arith.mulf %126, %127 : vector<16x32xf32>
    %c0_87 = arith.constant 0 : index
    %c0_88 = arith.constant 0 : index
    %129 = vector.load %arg22[%c0_87, %c0_88] : memref<32x32xf32, #tpu.memory_space<vmem>>, vector<32x32xf32>
    %cst_89 = arith.constant dense<0.000000e+00> : vector<16x32xf32>
    %130 = tpu.matmul %128, %129, %cst_89 {dimension_numbers = #tpu.dot_dimension_numbers<[1], [0], [0], [1], [0, 0, 1, 1], [], []>} : vector<16x32xf32>, vector<32x32xf32>, vector<16x32xf32> -> vector<16x32xf32>
    %c0_90 = arith.constant 0 : index
    %c0_91 = arith.constant 0 : index
    %131 = vector.load %arg23[%c0_90, %c0_91] : memref<32x32xf32, #tpu.memory_space<vmem>>, vector<32x32xf32>
    %cst_92 = arith.constant dense<0.000000e+00> : vector<16x32xf32>
    %132 = tpu.matmul %72, %131, %cst_92 {dimension_numbers = #tpu.dot_dimension_numbers<[1], [0], [0], [1], [0, 0, 1, 1], [], []>} : vector<16x32xf32>, vector<32x32xf32>, vector<16x32xf32> -> vector<16x32xf32>
    %133 = arith.addf %130, %132 : vector<16x32xf32>
    %c0_93 = arith.constant 0 : index
    %c0_94 = arith.constant 0 : index
    %134 = vector.load %arg24[%c0_93, %c0_94] : memref<1x32xf32, #tpu.memory_space<vmem>>, vector<1x32xf32>
    %135 = vector.broadcast %134 : vector<1x32xf32> to vector<16x32xf32>
    %136 = arith.addf %133, %135 : vector<16x32xf32>
    %cst_95 = arith.constant 0.000000e+00 : f32
    %137 = vector.broadcast %cst_95 : f32 to vector<16x32xf32>
    %138 = arith.maximumf %136, %137 : vector<16x32xf32>
    %c0_96 = arith.constant 0 : index
    %c0_97 = arith.constant 0 : index
    %139 = vector.load %arg25[%c0_96, %c0_97] : memref<32x16xf32, #tpu.memory_space<vmem>>, vector<32x16xf32>
    %cst_98 = arith.constant dense<0.000000e+00> : vector<16x16xf32>
    %140 = tpu.matmul %138, %139, %cst_98 {dimension_numbers = #tpu.dot_dimension_numbers<[1], [0], [0], [1], [0, 0, 1, 1], [], []>} : vector<16x32xf32>, vector<32x16xf32>, vector<16x16xf32> -> vector<16x16xf32>
    %c0_99 = arith.constant 0 : index
    %c0_100 = arith.constant 0 : index
    %141 = vector.load %arg26[%c0_99, %c0_100] : memref<1x16xf32, #tpu.memory_space<vmem>>, vector<1x16xf32>
    %142 = vector.broadcast %141 : vector<1x16xf32> to vector<16x16xf32>
    %143 = arith.addf %140, %142 : vector<16x16xf32>
    %cst_101 = arith.constant 0.000000e+00 : f32
    %144 = vector.broadcast %cst_101 : f32 to vector<16x16xf32>
    %145 = arith.maximumf %143, %144 : vector<16x16xf32>
    %c0_102 = arith.constant 0 : index
    %c0_103 = arith.constant 0 : index
    %146 = vector.load %arg27[%c0_102, %c0_103] : memref<16x1xf32, #tpu.memory_space<vmem>>, vector<16x1xf32>
    %cst_104 = arith.constant dense<0.000000e+00> : vector<16x1xf32>
    %147 = tpu.matmul %145, %146, %cst_104 {dimension_numbers = #tpu.dot_dimension_numbers<[1], [0], [0], [1], [0, 0, 1, 1], [], []>} : vector<16x16xf32>, vector<16x1xf32>, vector<16x1xf32> -> vector<16x1xf32>
    %c0_105 = arith.constant 0 : index
    %c0_106 = arith.constant 0 : index
    %148 = vector.load %arg28[%c0_105, %c0_106] : memref<1x1xf32, #tpu.memory_space<vmem>>, vector<1x1xf32>
    %149 = vector.broadcast %148 : vector<1x1xf32> to vector<16x1xf32>
    %150 = arith.addf %147, %149 : vector<16x1xf32>
    %cst_107 = arith.constant dense<0.000000e+00> : vector<16x1xf32>
    %151 = tpu.matmul %54, %31, %cst_107 {dimension_numbers = #tpu.dot_dimension_numbers<[1], [0], [0], [1], [0, 0, 1, 1], [], []>} : vector<16x2xf32>, vector<2x1xf32>, vector<16x1xf32> -> vector<16x1xf32>
    %152 = arith.divf %150, %151 : vector<16x1xf32>
    %c0_108 = arith.constant 0 : index
    %c0_109 = arith.constant 0 : index
    %153 = vector.load %arg29[%c0_108, %c0_109] : memref<16x1xf32, #tpu.memory_space<vmem>>, vector<16x1xf32>
    tpu.vector_store %arg29[%c0_108, %c0_109], %152 {strides = array<i32>} : memref<16x1xf32, #tpu.memory_space<vmem>>, vector<16x1xf32>,
    return
  }
}

</mosaic_0001>

<llo_original>
// kernel: tpu_custom_call.1
$region0: #{tpu_custom_call.1}
  #allocation0 [shape = 'u32[]', space=smem, size = 0x4, offset = 0x4, fixed_abs, tag = 'smem constant byte address 0x4 - core index']
  #allocation1 [shape = 'u32[144,128]{1,0:T(1,128)}', space=vmem, size = 0x12000, scoped, tag = 'internal scratch']
  #allocation2 [shape = 'f32[1,1]{1,0:T(1,128)S(1)}', space=vmem, size = 0x200, scoped, tag = 'scoped memory for tpu_custom_call.1']
  #allocation3 [shape = 'f32[1,1]{1,0:T(1,128)S(1)}', space=vmem, size = 0x200, scoped, tag = 'scoped memory for tpu_custom_call.1']
  %s0 = inlined_call_operand.smem [shape: u32[30], index: -1, kind: input, shape index: {}]
  %s1 = sld [smem:[%s0]]
  %s2 = scalar_lea.smem %s0, 1
  %s3 = sld [smem:[%s2]]
  %s4 = scalar_lea.smem %s0, 2
  %s5 = sld [smem:[%s4]]
  %s6 = scalar_lea.smem %s0, 3
  %s7 = sld [smem:[%s6]]
  %s8 = scalar_lea.smem %s0, 4
  %s9 = sld [smem:[%s8]]
  %s10 = scalar_lea.smem %s0, 5
  %s11 = sld [smem:[%s10]]
  %s12 = scalar_lea.smem %s0, 6
  %s13 = sld [smem:[%s12]]
  %s14 = scalar_lea.smem %s0, 7
  %s15 = sld [smem:[%s14]]
  %s16 = scalar_lea.smem %s0, 8
  %s17 = sld [smem:[%s16]]
  %s18 = scalar_lea.smem %s0, 9
  %s19 = sld [smem:[%s18]]
  %s20 = scalar_lea.smem %s0, 10
  %s21 = sld [smem:[%s20]]
  %s22 = scalar_lea.smem %s0, 11
  %s23 = sld [smem:[%s22]]
  %s24 = scalar_lea.smem %s0, 12
  %s25 = sld [smem:[%s24]]
  %s26 = scalar_lea.smem %s0, 13
  %s27 = sld [smem:[%s26]]
  %s28 = scalar_lea.smem %s0, 14
  %s29 = sld [smem:[%s28]]
  %s30 = scalar_lea.smem %s0, 15
  %s31 = sld [smem:[%s30]]
  %s32 = scalar_lea.smem %s0, 16
  %s33 = sld [smem:[%s32]]
  %s34 = scalar_lea.smem %s0, 17
  %s35 = sld [smem:[%s34]]
  %s36 = scalar_lea.smem %s0, 18
  %s37 = sld [smem:[%s36]]
  %s38 = scalar_lea.smem %s0, 19
  %s39 = sld [smem:[%s38]]
  %s40 = scalar_lea.smem %s0, 20
  %s41 = sld [smem:[%s40]]
  %s42 = scalar_lea.smem %s0, 21
  %s43 = sld [smem:[%s42]]
  %s44 = scalar_lea.smem %s0, 22
  %s45 = sld [smem:[%s44]]
  %s46 = scalar_lea.smem %s0, 23
  %s47 = sld [smem:[%s46]]
  %s48 = scalar_lea.smem %s0, 24
  %s49 = sld [smem:[%s48]]
  %s50 = scalar_lea.smem %s0, 25
  %s51 = sld [smem:[%s50]]
  %s52 = scalar_lea.smem %s0, 26
  %s53 = sld [smem:[%s52]]
  %s54 = scalar_lea.smem %s0, 27
  %s55 = sld [smem:[%s54]]
  %s56 = scalar_lea.smem %s0, 28
  %s57 = sld [smem:[%s56]]
  %s58 = scalar_lea.smem %s0, 29
  %s59 = sld [smem:[%s58]]
  %s60 = sld [smem:[#allocation0]]
  $region174: #{tpu_custom_call.1} parent=0
    _
  %s62 = ssub.s32 1, %s60
  %s63 = scalar_select 0, %s62, %s60
  %v64 = vstv %s27
  %65 = vst [vmem:[#allocation2] sm:$0x1] %v64
  %v66 = vstv %s57
  %67 = vst [vmem:[#allocation3] sm:$0x1] %v66
  $region1: #{tpu_custom_call.1} parent=0
    #allocation4 [shape = 'u8[4096]{0}', space=vmem, size = 0x1000, scoped, tag = 'input window, operand 0, single buffered']
    #allocation5 [shape = 's32[1]{0}', space=sflag, size = 0x4, scoped, tag = 'scoped memory for tpu_custom_call.1']
    #allocation6 [shape = 'u8[8192]{0}', space=vmem, size = 0x2000, scoped, tag = 'input window, operand 1, single buffered']
    #allocation7 [shape = 's32[1]{0}', space=sflag, size = 0x4, scoped, tag = 'scoped memory for tpu_custom_call.1']
    #allocation8 [shape = 'u8[512]{0}', space=vmem, size = 0x400, scoped, tag = 'input window, operand 8, single buffered']
    #allocation9 [shape = 'u8[8192]{0}', space=vmem, size = 0x2000, scoped, tag = 'input window, operand 9, single buffered']
    #allocation10 [shape = 's32[1]{0}', space=sflag, size = 0x4, scoped, tag = 'scoped memory for tpu_custom_call.1']
    #allocation11 [shape = 'u8[8192]{0}', space=vmem, size = 0x2000, scoped, tag = 'input window, operand 10, single buffered']
    #allocation12 [shape = 'u8[512]{0}', space=vmem, size = 0x400, scoped, tag = 'input window, operand 11, single buffered']
    #allocation13 [shape = 's32[1]{0}', space=sflag, size = 0x4, scoped, tag = 'scoped memory for tpu_custom_call.1']
    #allocation14 [shape = 'u8[512]{0}', space=vmem, size = 0x400, scoped, tag = 'input window, operand 14, single buffered']
    #allocation15 [shape = 'u8[512]{0}', space=vmem, size = 0x400, scoped, tag = 'input window, operand 15, single buffered']
    #allocation16 [shape = 's32[1]{0}', space=sflag, size = 0x4, scoped, tag = 'scoped memory for tpu_custom_call.1']
    #allocation17 [shape = 'u8[512]{0}', space=vmem, size = 0x400, scoped, tag = 'input window, operand 17, single buffered']
    #allocation18 [shape = 'u8[1024]{0}', space=vmem, size = 0x400, scoped, tag = 'input window, operand 19, single buffered']
    #allocation19 [shape = 's32[1]{0}', space=sflag, size = 0x4, scoped, tag = 'scoped memory for tpu_custom_call.1']
    #allocation20 [shape = 'u8[1024]{0}', space=vmem, size = 0x400, scoped, tag = 'input window, operand 21, single buffered']
    #allocation21 [shape = 'u8[16384]{0}', space=vmem, size = 0x4000, scoped, tag = 'input window, operand 23, single buffered']
    #allocation22 [shape = 's32[1]{0}', space=sflag, size = 0x4, scoped, tag = 'scoped memory for tpu_custom_call.1']
    %68 = vsyncpa [#allocation5], 0
    %69 = vsyncpa [#allocation7], 0
    %70 = vsyncpa [#allocation10], 0
    %71 = vsyncpa [#allocation13], 0
    %72 = vsyncpa [#allocation16], 0
    %73 = vsyncpa [#allocation19], 0
    %74 = vsyncpa [#allocation22], 0
    // Predicated region
    $region2: #{tpu_custom_call.1} parent=1 // pred_check
      _
    $region3: #{tpu_custom_call.1} parent=1 // pred_check_branch
      %76 = sbr.rel (0) target = $region5
    $region4: #{tpu_custom_call.1} parent=1 // pred_region
      %s78 = ssub.s32 128, 128
      %79 = vsyncadd [#allocation5], %s78
      %s81 = sshll.u32 [#allocation4], 4
      %s82 = int_to_ptr.vmem [resolvable:$true] %s81
      %84 = dma.hbm_to_vmem [thread:$0]  %s1, 128, %s82, [#allocation5]
    $region5: #{tpu_custom_call.1} parent=1 // pred_fallthru
      _
    // Predicated region
    $region6: #{tpu_custom_call.1} parent=1 // pred_check
      _
    $region7: #{tpu_custom_call.1} parent=1 // pred_check_branch
      %86 = sbr.rel (0) target = $region9
    $region8: #{tpu_custom_call.1} parent=1 // pred_region
      %s88 = ssub.s32 256, 256
      %89 = vsyncadd [#allocation7], %s88
      %s90 = sshll.u32 [#allocation6], 4
      %s91 = int_to_ptr.vmem [resolvable:$true] %s90
      %96 = dma.hbm_to_vmem [thread:$0]  %s3, 256, %s91, [#allocation7], 128, 128, 8
    $region9: #{tpu_custom_call.1} parent=1 // pred_fallthru
      _
    // Predicated region
    $region10: #{tpu_custom_call.1} parent=1 // pred_check
      _
    $region11: #{tpu_custom_call.1} parent=1 // pred_check_branch
      %98 = sbr.rel (0) target = $region13
    $region12: #{tpu_custom_call.1} parent=1 // pred_region
      _
    $region13: #{tpu_custom_call.1} parent=1 // pred_fallthru
      _
    // Predicated region
    $region14: #{tpu_custom_call.1} parent=1 // pred_check
      _
    $region15: #{tpu_custom_call.1} parent=1 // pred_check_branch
      %100 = sbr.rel (0) target = $region17
    $region16: #{tpu_custom_call.1} parent=1 // pred_region
      _
    $region17: #{tpu_custom_call.1} parent=1 // pred_fallthru
      _
    // Predicated region
    $region18: #{tpu_custom_call.1} parent=1 // pred_check
      _
    $region19: #{tpu_custom_call.1} parent=1 // pred_check_branch
      %102 = sbr.rel (0) target = $region21
    $region20: #{tpu_custom_call.1} parent=1 // pred_region
      _
    $region21: #{tpu_custom_call.1} parent=1 // pred_fallthru
      _
    // Predicated region
    $region22: #{tpu_custom_call.1} parent=1 // pred_check
      _
    $region23: #{tpu_custom_call.1} parent=1 // pred_check_branch
      %104 = sbr.rel (0) target = $region25
    $region24: #{tpu_custom_call.1} parent=1 // pred_region
      _
    $region25: #{tpu_custom_call.1} parent=1 // pred_fallthru
      _
    // Predicated region
    $region26: #{tpu_custom_call.1} parent=1 // pred_check
      _
    $region27: #{tpu_custom_call.1} parent=1 // pred_check_branch
      %106 = sbr.rel (0) target = $region29
    $region28: #{tpu_custom_call.1} parent=1 // pred_region
      _
    $region29: #{tpu_custom_call.1} parent=1 // pred_fallthru
      _
    // Predicated region
    $region30: #{tpu_custom_call.1} parent=1 // pred_check
      _
    $region31: #{tpu_custom_call.1} parent=1 // pred_check_branch
      %108 = sbr.rel (0) target = $region33
    $region32: #{tpu_custom_call.1} parent=1 // pred_region
      _
    $region33: #{tpu_custom_call.1} parent=1 // pred_fallthru
      _
    // Predicated region
    $region34: #{tpu_custom_call.1} parent=1 // pred_check
      _
    $region35: #{tpu_custom_call.1} parent=1 // pred_check_branch
      %110 = sbr.rel (0) target = $region37
    $region36: #{tpu_custom_call.1} parent=1 // pred_region
      %s112 = ssub.s32 16, 16
      %113 = vsyncadd [#allocation7], %s112
      %s115 = sshll.u32 [#allocation8], 4
      %s116 = int_to_ptr.vmem [resolvable:$true] %s115
      %118 = dma.hbm_to_vmem [thread:$0]  %s17, 16, %s116, [#allocation7]
    $region37: #{tpu_custom_call.1} parent=1 // pred_fallthru
      _
    // Predicated region
    $region38: #{tpu_custom_call.1} parent=1 // pred_check
      _
    $region39: #{tpu_custom_call.1} parent=1 // pred_check_branch
      %120 = sbr.rel (0) target = $region41
    $region40: #{tpu_custom_call.1} parent=1 // pred_region
      %s122 = ssub.s32 256, 256
      %123 = vsyncadd [#allocation10], %s122
      %s124 = sshll.u32 [#allocation9], 4
      %s125 = int_to_ptr.vmem [resolvable:$true] %s124
      %130 = dma.hbm_to_vmem [thread:$0]  %s19, 256, %s125, [#allocation10], 128, 128, 8
    $region41: #{tpu_custom_call.1} parent=1 // pred_fallthru
      _
    // Predicated region
    $region42: #{tpu_custom_call.1} parent=1 // pred_check
      _
    $region43: #{tpu_custom_call.1} parent=1 // pred_check_branch
      %132 = sbr.rel (0) target = $region45
    $region44: #{tpu_custom_call.1} parent=1 // pred_region
      %s134 = ssub.s32 256, 256
      %135 = vsyncadd [#allocation10], %s134
      %s136 = sshll.u32 [#allocation11], 4
      %s137 = int_to_ptr.vmem [resolvable:$true] %s136
      %142 = dma.hbm_to_vmem [thread:$0]  %s21, 256, %s137, [#allocation10], 128, 128, 8
    $region45: #{tpu_custom_call.1} parent=1 // pred_fallthru
      _
    // Predicated region
    $region46: #{tpu_custom_call.1} parent=1 // pred_check
      _
    $region47: #{tpu_custom_call.1} parent=1 // pred_check_branch
      %144 = sbr.rel (0) target = $region49
    $region48: #{tpu_custom_call.1} parent=1 // pred_region
      %s146 = ssub.s32 16, 16
      %147 = vsyncadd [#allocation13], %s146
      %s149 = sshll.u32 [#allocation12], 4
      %s150 = int_to_ptr.vmem [resolvable:$true] %s149
      %152 = dma.hbm_to_vmem [thread:$0]  %s23, 16, %s150, [#allocation13]
    $region49: #{tpu_custom_call.1} parent=1 // pred_fallthru
      _
    // Predicated region
    $region50: #{tpu_custom_call.1} parent=1 // pred_check
      _
    $region51: #{tpu_custom_call.1} parent=1 // pred_check_branch
      %154 = sbr.rel (0) target = $region53
    $region52: #{tpu_custom_call.1} parent=1 // pred_region
      _
    $region53: #{tpu_custom_call.1} parent=1 // pred_fallthru
      _
    // Predicated region
    $region54: #{tpu_custom_call.1} parent=1 // pred_check
      _
    $region55: #{tpu_custom_call.1} parent=1 // pred_check_branch
      %156 = sbr.rel (0) target = $region57
    $region56: #{tpu_custom_call.1} parent=1 // pred_region
      _
    $region57: #{tpu_custom_call.1} parent=1 // pred_fallthru
      _
    // Predicated region
    $region58: #{tpu_custom_call.1} parent=1 // pred_check
      _
    $region59: #{tpu_custom_call.1} parent=1 // pred_check_branch
      %158 = sbr.rel (0) target = $region61
    $region60: #{tpu_custom_call.1} parent=1 // pred_region
      %s160 = ssub.s32 16, 16
      %161 = vsyncadd [#allocation13], %s160
      %s163 = sshll.u32 [#allocation14], 4
      %s164 = int_to_ptr.vmem [resolvable:$true] %s163
      %166 = dma.hbm_to_vmem [thread:$0]  %s29, 16, %s164, [#allocation13]
    $region61: #{tpu_custom_call.1} parent=1 // pred_fallthru
      _
    // Predicated region
    $region62: #{tpu_custom_call.1} parent=1 // pred_check
      _
    $region63: #{tpu_custom_call.1} parent=1 // pred_check_branch
      %168 = sbr.rel (0) target = $region65
    $region64: #{tpu_custom_call.1} parent=1 // pred_region
      %s170 = ssub.s32 16, 16
      %171 = vsyncadd [#allocation16], %s170
      %s173 = sshll.u32 [#allocation15], 4
      %s174 = int_to_ptr.vmem [resolvable:$true] %s173
      %176 = dma.hbm_to_vmem [thread:$0]  %s31, 16, %s174, [#allocation16]
    $region65: #{tpu_custom_call.1} parent=1 // pred_fallthru
      _
    // Predicated region
    $region66: #{tpu_custom_call.1} parent=1 // pred_check
      _
    $region67: #{tpu_custom_call.1} parent=1 // pred_check_branch
      %178 = sbr.rel (0) target = $region69
    $region68: #{tpu_custom_call.1} parent=1 // pred_region
      _
    $region69: #{tpu_custom_call.1} parent=1 // pred_fallthru
      _
    // Predicated region
    $region70: #{tpu_custom_call.1} parent=1 // pred_check
      _
    $region71: #{tpu_custom_call.1} parent=1 // pred_check_branch
      %180 = sbr.rel (0) target = $region73
    $region72: #{tpu_custom_call.1} parent=1 // pred_region
      %s182 = ssub.s32 16, 16
      %183 = vsyncadd [#allocation16], %s182
      %s185 = sshll.u32 [#allocation17], 4
      %s186 = int_to_ptr.vmem [resolvable:$true] %s185
      %188 = dma.hbm_to_vmem [thread:$0]  %s35, 16, %s186, [#allocation16]
    $region73: #{tpu_custom_call.1} parent=1 // pred_fallthru
      _
    // Predicated region
    $region74: #{tpu_custom_call.1} parent=1 // pred_check
      _
    $region75: #{tpu_custom_call.1} parent=1 // pred_check_branch
      %190 = sbr.rel (0) target = $region77
    $region76: #{tpu_custom_call.1} parent=1 // pred_region
      _
    $region77: #{tpu_custom_call.1} parent=1 // pred_fallthru
      _
    // Predicated region
    $region78: #{tpu_custom_call.1} parent=1 // pred_check
      _
    $region79: #{tpu_custom_call.1} parent=1 // pred_check_branch
      %192 = sbr.rel (0) target = $region81
    $region80: #{tpu_custom_call.1} parent=1 // pred_region
      %s194 = ssub.s32 32, 32
      %195 = vsyncadd [#allocation19], %s194
      %s196 = sshll.u32 [#allocation18], 4
      %s197 = int_to_ptr.vmem [resolvable:$true] %s196
      %202 = dma.hbm_to_vmem [thread:$0]  %s39, 32, %s197, [#allocation19], 16, 16, 1
    $region81: #{tpu_custom_call.1} parent=1 // pred_fallthru
      _
    // Predicated region
    $region82: #{tpu_custom_call.1} parent=1 // pred_check
      _
    $region83: #{tpu_custom_call.1} parent=1 // pred_check_branch
      %204 = sbr.rel (0) target = $region85
    $region84: #{tpu_custom_call.1} parent=1 // pred_region
      _
    $region85: #{tpu_custom_call.1} parent=1 // pred_fallthru
      _
    // Predicated region
    $region86: #{tpu_custom_call.1} parent=1 // pred_check
      _
    $region87: #{tpu_custom_call.1} parent=1 // pred_check_branch
      %206 = sbr.rel (0) target = $region89
    $region88: #{tpu_custom_call.1} parent=1 // pred_region
      %s208 = ssub.s32 32, 32
      %209 = vsyncadd [#allocation19], %s208
      %s210 = sshll.u32 [#allocation20], 4
      %s211 = int_to_ptr.vmem [resolvable:$true] %s210
      %216 = dma.hbm_to_vmem [thread:$0]  %s43, 32, %s211, [#allocation19], 16, 16, 1
    $region89: #{tpu_custom_call.1} parent=1 // pred_fallthru
      _
    // Predicated region
    $region90: #{tpu_custom_call.1} parent=1 // pred_check
      _
    $region91: #{tpu_custom_call.1} parent=1 // pred_check_branch
      %218 = sbr.rel (0) target = $region93
    $region92: #{tpu_custom_call.1} parent=1 // pred_region
      _
    $region93: #{tpu_custom_call.1} parent=1 // pred_fallthru
      _
    // Predicated region
    $region94: #{tpu_custom_call.1} parent=1 // pred_check
      _
    $region95: #{tpu_custom_call.1} parent=1 // pred_check_branch
      %220 = sbr.rel (0) target = $region97
    $region96: #{tpu_custom_call.1} parent=1 // pred_region
      %s222 = ssub.s32 512, 512
      %223 = vsyncadd [#allocation22], %s222
      %s224 = sshll.u32 [#allocation21], 4
      %s225 = int_to_ptr.vmem [resolvable:$true] %s224
      %230 = dma.hbm_to_vmem [thread:$0]  %s47, 512, %s225, [#allocation22], 128, 128, 8
    $region97: #{tpu_custom_call.1} parent=1 // pred_fallthru
      _
    // Predicated region
    $region98: #{tpu_custom_call.1} parent=1 // pred_check
      _
    $region99: #{tpu_custom_call.1} parent=1 // pred_check_branch
      %232 = sbr.rel (0) target = $region101
    $region100: #{tpu_custom_call.1} parent=1 // pred_region
      _
    $region101: #{tpu_custom_call.1} parent=1 // pred_fallthru
      _
    // Predicated region
    $region102: #{tpu_custom_call.1} parent=1 // pred_check
      _
    $region103: #{tpu_custom_call.1} parent=1 // pred_check_branch
      %234 = sbr.rel (0) target = $region105
    $region104: #{tpu_custom_call.1} parent=1 // pred_region
      _
    $region105: #{tpu_custom_call.1} parent=1 // pred_fallthru
      _
    // Predicated region
    $region106: #{tpu_custom_call.1} parent=1 // pred_check
      _
    $region107: #{tpu_custom_call.1} parent=1 // pred_check_branch
      %236 = sbr.rel (0) target = $region109
    $region108: #{tpu_custom_call.1} parent=1 // pred_region
      _
    $region109: #{tpu_custom_call.1} parent=1 // pred_fallthru
      _
    // Predicated region
    $region110: #{tpu_custom_call.1} parent=1 // pred_check
      _
    $region111: #{tpu_custom_call.1} parent=1 // pred_check_branch
      %238 = sbr.rel (0) target = $region113
    $region112: #{tpu_custom_call.1} parent=1 // pred_region
      _
    $region113: #{tpu_custom_call.1} parent=1 // pred_fallthru
      _
    // Predicated region
    $region114: #{tpu_custom_call.1} parent=1 // pred_check
      _
    $region115: #{tpu_custom_call.1} parent=1 // pred_check_branch
      %240 = sbr.rel (0) target = $region117
    $region116: #{tpu_custom_call.1} parent=1 // pred_region
      _
    $region117: #{tpu_custom_call.1} parent=1 // pred_fallthru
      _
    // Predicated region
    $region118: #{tpu_custom_call.1} parent=1 // pred_check
      _
    $region119: #{tpu_custom_call.1} parent=1 // pred_check_branch
      %242 = sbr.rel (0) target = $region121
    $region120: #{tpu_custom_call.1} parent=1 // pred_region
      %243 = dma.done [#allocation5], 128
    $region121: #{tpu_custom_call.1} parent=1 // pred_fallthru
      _
    // Predicated region
    $region122: #{tpu_custom_call.1} parent=1 // pred_check
      _
    $region123: #{tpu_custom_call.1} parent=1 // pred_check_branch
      %245 = sbr.rel (0) target = $region125
    $region124: #{tpu_custom_call.1} parent=1 // pred_region
      %246 = dma.done [#allocation7], 256
    $region125: #{tpu_custom_call.1} parent=1 // pred_fallthru
      _
    // Predicated region
    $region126: #{tpu_custom_call.1} parent=1 // pred_check
      _
    $region127: #{tpu_custom_call.1} parent=1 // pred_check_branch
      %248 = sbr.rel (0) target = $region129
    $region128: #{tpu_custom_call.1} parent=1 // pred_region
      %249 = dma.done [#allocation7], 16
    $region129: #{tpu_custom_call.1} parent=1 // pred_fallthru
      _
    // Predicated region
    $region130: #{tpu_custom_call.1} parent=1 // pred_check
      _
    $region131: #{tpu_custom_call.1} parent=1 // pred_check_branch
      %251 = sbr.rel (0) target = $region133
    $region132: #{tpu_custom_call.1} parent=1 // pred_region
      %252 = dma.done [#allocation10], 256
    $region133: #{tpu_custom_call.1} parent=1 // pred_fallthru
      _
    // Predicated region
    $region134: #{tpu_custom_call.1} parent=1 // pred_check
      _
    $region135: #{tpu_custom_call.1} parent=1 // pred_check_branch
      %254 = sbr.rel (0) target = $region137
    $region136: #{tpu_custom_call.1} parent=1 // pred_region
      %255 = dma.done [#allocation10], 256
    $region137: #{tpu_custom_call.1} parent=1 // pred_fallthru
      _
    // Predicated region
    $region138: #{tpu_custom_call.1} parent=1 // pred_check
      _
    $region139: #{tpu_custom_call.1} parent=1 // pred_check_branch
      %257 = sbr.rel (0) target = $region141
    $region140: #{tpu_custom_call.1} parent=1 // pred_region
      %258 = dma.done [#allocation13], 16
    $region141: #{tpu_custom_call.1} parent=1 // pred_fallthru
      _
    // Predicated region
    $region142: #{tpu_custom_call.1} parent=1 // pred_check
      _
    $region143: #{tpu_custom_call.1} parent=1 // pred_check_branch
      %260 = sbr.rel (0) target = $region145
    $region144: #{tpu_custom_call.1} parent=1 // pred_region
      %261 = dma.done [#allocation13], 16
    $region145: #{tpu_custom_call.1} parent=1 // pred_fallthru
      _
    // Predicated region
    $region146: #{tpu_custom_call.1} parent=1 // pred_check
      _
    $region147: #{tpu_custom_call.1} parent=1 // pred_check_branch
      %263 = sbr.rel (0) target = $region149
    $region148: #{tpu_custom_call.1} parent=1 // pred_region
      %264 = dma.done [#allocation16], 16
    $region149: #{tpu_custom_call.1} parent=1 // pred_fallthru
      _
    // Predicated region
    $region150: #{tpu_custom_call.1} parent=1 // pred_check
      _
    $region151: #{tpu_custom_call.1} parent=1 // pred_check_branch
      %266 = sbr.rel (0) target = $region153
    $region152: #{tpu_custom_call.1} parent=1 // pred_region
      %267 = dma.done [#allocation16], 16
    $region153: #{tpu_custom_call.1} parent=1 // pred_fallthru
      _
    // Predicated region
    $region154: #{tpu_custom_call.1} parent=1 // pred_check
      _
    $region155: #{tpu_custom_call.1} parent=1 // pred_check_branch
      %269 = sbr.rel (0) target = $region157
    $region156: #{tpu_custom_call.1} parent=1 // pred_region
      %270 = dma.done [#allocation19], 32
    $region157: #{tpu_custom_call.1} parent=1 // pred_fallthru
      _
    // Predicated region
    $region158: #{tpu_custom_call.1} parent=1 // pred_check
      _
    $region159: #{tpu_custom_call.1} parent=1 // pred_check_branch
      %272 = sbr.rel (0) target = $region161
    $region160: #{tpu_custom_call.1} parent=1 // pred_region
      %273 = dma.done [#allocation19], 32
    $region161: #{tpu_custom_call.1} parent=1 // pred_fallthru
      _
    // Predicated region
    $region162: #{tpu_custom_call.1} parent=1 // pred_check
      _
    $region163: #{tpu_custom_call.1} parent=1 // pred_check_branch
      %275 = sbr.rel (0) target = $region165
    $region164: #{tpu_custom_call.1} parent=1 // pred_region
      %276 = dma.done [#allocation22], 512
    $region165: #{tpu_custom_call.1} parent=1 // pred_fallthru
      _
    %v277 = vld [vmem:[%s7] sm:$0x3]
    %v278 = vld [vmem:[#allocation8] sm:$0x1]
    %vm279 = vcmask 7168
    %v281 = vsel %vm279, %v277, 0
    %vm283 = vcmask 1040384
    %v285 = vsel %vm283, %v278, 0
    %287 = vmatprep.subr.mxu0 0.0
    %288 = vmatpush1.msra.mxu0 0.0
    %289 = vmatprep.subr.mxu0 0.0
    %290 = vmatpush1.msra.mxu0 0.0
    %291 = vmatprep.subr.mxu0 0.0
    %292 = vmatpush1.msra.mxu0 0.0
    %293 = vmatprep.subr.mxu0 0.0
    %294 = vmatpush1.msra.mxu0 0.0
    %295 = vmatprep.subr.mxu0 0.0
    %296 = vmatpush1.msra.mxu0 0.0
    %297 = vmatprep.subr.mxu0 0.0
    %298 = vmatpush1.msra.mxu0 0.0
    %299 = vmatprep.subr.mxu0 0.0
    %300 = vmatpush1.msra.mxu0 0.0
    %301 = vmatprep.subr.mxu0 0.0
    %302 = vmatpush1.msra.mxu0 0.0
    %303 = vmatprep.subr.mxu0 0.0
    %304 = vmatpush1.msra.mxu0 0.0
    %305 = vmatprep.subr.mxu0 0.0
    %306 = vmatpush1.msra.mxu0 0.0
    %307 = vmatprep.subr.mxu0 0.0
    %308 = vmatpush1.msra.mxu0 0.0
    %309 = vmatprep.subr.mxu0 0.0
    %310 = vmatpush1.msra.mxu0 0.0
    %311 = vmatprep.subr.mxu0 0.0
    %312 = vmatpush1.msra.mxu0 0.0
    %313 = vmatprep.subr.mxu0 0.0
    %314 = vmatpush1.msra.mxu0 0.0
    %315 = vmatprep.subr.mxu0 0.0
    %316 = vmatpush1.msra.mxu0 0.0
    %317 = vmatprep.subr.mxu0 0.0
    %318 = vmatpush1.msra.mxu0 %v285
    %319 = vmatprep.subr.mxu0 0.0
    %320 = vmatpush2.msra.mxu0 0.0
    %321 = vmatprep.subr.mxu0 0.0
    %322 = vmatpush2.msra.mxu0 0.0
    %323 = vmatprep.subr.mxu0 0.0
    %324 = vmatpush2.msra.mxu0 0.0
    %325 = vmatprep.subr.mxu0 0.0
    %326 = vmatpush2.msra.mxu0 0.0
    %327 = vmatprep.subr.mxu0 0.0
    %328 = vmatpush2.msra.mxu0 0.0
    %329 = vmatprep.subr.mxu0 0.0
    %330 = vmatpush2.msra.mxu0 0.0
    %331 = vmatprep.subr.mxu0 0.0
    %332 = vmatpush2.msra.mxu0 0.0
    %333 = vmatprep.subr.mxu0 0.0
    %334 = vmatpush2.msra.mxu0 0.0
    %335 = vmatprep.subr.mxu0 0.0
    %336 = vmatpush2.msra.mxu0 0.0
    %337 = vmatprep.subr.mxu0 0.0
    %338 = vmatpush2.msra.mxu0 0.0
    %339 = vmatprep.subr.mxu0 0.0
    %340 = vmatpush2.msra.mxu0 0.0
    %341 = vmatprep.subr.mxu0 0.0
    %342 = vmatpush2.msra.mxu0 0.0
    %343 = vmatprep.subr.mxu0 0.0
    %344 = vmatpush2.msra.mxu0 0.0
    %345 = vmatprep.subr.mxu0 0.0
    %346 = vmatpush2.msra.mxu0 0.0
    %347 = vmatprep.subr.mxu0 0.0
    %348 = vmatpush2.msra.mxu0 0.0
    %349 = vmatprep.subr.mxu0 0.0
    %350 = vmatpush2.msra.mxu0 0.0
    %351 = vmatprep.mubr.f32.mxu0 0.0
    %352 = vmatmul.mubr.f32.gmra.mxu0 %v281
    %v353 = vpop.f32.mrf.mxu0
    %v354 = vadd.f32 0.0, %v353
    %v355 = vpop.f32.mrf.mxu0
    %356 = vdwg.mxu0
    %v357 = vmul.f32 %v354, 6.2831855
    %v358 = vand.u32 2147483647, %v357
    %vm359 = vcmp.le.f32.partialorder %v358, 0.7853982
    %vm360 = vcmp.lt.s32.totalorder %v357, 0
    %v361 = vand.u32 %v357, 2139095040
    %v362 = vshrl.u32 %v361, 23
    %v363 = vsub.s32 %v362, 127
    %v364 = vand.u32 2147483647, %v357
    %v365 = vand.u32 %v364, 8388607
    %v366 = vor.u32 %v365, 8388608
    %v367 = vsub.s32 0, %v366
    %v368 = vadd.s32 %v363, 1
    %vm369 = vcmp.gt.s32.totalorder %v368, 0
    %v370 = vsel %vm369, %v368, 0
    %v371 = vshrl.u32 %v370, 5
    %v372 = vand.u32 %v370, 31
    %v373 = vsub.s32 32, %v372
    %v374 = vshrl.u32 683565275, %v373
    %v375 = vshll.u32 683565275, %v372
    %v376 = vshrl.u32 2475754826, %v373
    %v377 = vor.u32 %v375, %v376
    %v378 = vshll.u32 2475754826, %v372
    %v379 = vshrl.u32 2131351028, %v373
    %v380 = vor.u32 %v378, %v379
    %v381 = vshll.u32 2131351028, %v372
    %v382 = vshrl.u32 2102212464, %v373
    %v383 = vor.u32 %v381, %v382
    %v384 = vshll.u32 2102212464, %v372
    %v385 = vshrl.u32 920167782, %v373
    %v386 = vor.u32 %v384, %v385
    %v387 = vshll.u32 920167782, %v372
    %v388 = vshrl.u32 1326507024, %v373
    %v389 = vor.u32 %v387, %v388
    %vm390 = vcmp.lt.s32.totalorder %v371, 1
    %vm391 = vcmp.lt.s32.totalorder %v371, 2
    %vm392 = vcmp.lt.s32.totalorder %v371, 3
    %vm393 = vcmp.lt.s32.totalorder %v371, 4
    %v394 = vsel %vm390, %v374, %v377
    %v395 = vsel %vm393, %v383, 2102212464
    %v396 = vsel %vm392, %v380, %v395
    %v397 = vsel %vm391, %v394, %v396
    %v398 = vsel %vm390, %v377, %v380
    %v399 = vsel %vm393, %v386, 920167782
    %v400 = vsel %vm392, %v383, %v399
    %v401 = vsel %vm391, %v398, %v400
    %v402 = vsel %vm390, %v380, %v383
    %v403 = vsel %vm393, %v389, 1326507024
    %v404 = vsel %vm392, %v386, %v403
    %v405 = vsel %vm391, %v402, %v404
    %v406 = vshll.u32 %v366, 8
    %v407 = vmul.u32.u64.compose %v406, %v405
    %v408 = vextract.low.u32 %v407
    %v409 = vextract.high.u32 %v407
    %v410 = vmul.u32.u64.compose %v406, %v401
    %v411 = vextract.low.u32 %v410
    %v412 = vextract.high.u32 %v410
    %v413 = vmul.u32 %v406, %v397
    %v414 = vadd.s32 %v409, %v411
    %vm415 = vc.u32 %v409, %v411
    %v416 = vadd.s32 %v412, 1
    %v417 = vsel %vm415, %v416, %v412
    %v418 = vadd.s32 %v413, %v417
    %v419 = vadd.s32 %v418, 536870912
    %v420 = vshrl.u32 %v419, 30
    %v421 = vshll.u32 %v420, 30
    %v422 = vsub.s32 %v418, %v421
    %vm423 = vcmp.lt.s32.totalorder %v422, 0
    %v424 = vsub.s32 0, %v422
    %v425 = vsel %vm423, %v424, %v422
    %v426 = vclz %v425
    %v427 = vsub.s32 %v426, 2
    %vm428 = vcmp.gt.s32.totalorder 0, %v427
    %v429 = vsel %vm428, 0, %v427
    %v430 = vsub.s32 32, %v429
    %v431 = vshll.u32 %v422, %v429
    %v432 = vshrl.u32 %v414, %v430
    %v433 = vor.u32 %v431, %v432
    %v434 = vsub.s32 4294967266, %v429
    %v435 = vadd.s32 %v434, 127
    %v436 = vshll.u32 %v435, 23
    %v437 = vor.u32 4788187, %v436
    %v438 = vand.u32 2147483647, %v437
    %v440 = vcvt.s32.f32 %v433
    %v441 = vmul.f32 %v440, %v438
    %v442 = vxor.u32 %v441, 2147483648
    %v443 = vsel %vm360, %v442, %v441
    %v444 = vsub.s32 4, %v420
    %v445 = vsel %vm360, %v444, %v420
    %v446 = vsel %vm359, %v357, %v443
    %v447 = vsel %vm359, 0, %v445
    %v448 = vcosq.f32.pop %v446
    %v449 = vsinq.f32.pop %v446
    %vm450 = vweird.f32 %v357
    %v451 = vadd.s32 %v447, 3
    %v452 = vand.u32 %v451, 3
    %vm453 = vcmp.lt.s32.totalorder %v452, 2
    %vm454 = vcmp.eq.s32.totalorder %v452, 0
    %v455 = vxor.u32 %v449, 2147483648
    %v456 = vsel %vm454, %v448, %v455
    %vm457 = vcmp.eq.s32.totalorder %v452, 2
    %v458 = vxor.u32 %v448, 2147483648
    %v459 = vsel %vm457, %v458, %v449
    %v460 = vsel %vm453, %v456, %v459
    %v461 = vsel %vm450, nan, %v460
    %v462 = vld [vmem:[#allocation9] sm:$0xff]
    %v463 = vld [vmem:[#allocation9 + $0x8] sm:$0xff]
    %v464 = vand.u32 2147483647, %v357
    %vm465 = vcmp.le.f32.partialorder %v464, 0.7853982
    %vm466 = vcmp.lt.s32.totalorder %v357, 0
    %v467 = vand.u32 %v357, 2139095040
    %v468 = vshrl.u32 %v467, 23
    %v469 = vsub.s32 %v468, 127
    %v470 = vand.u32 2147483647, %v357
    %v471 = vand.u32 %v470, 8388607
    %v472 = vor.u32 %v471, 8388608
    %v473 = vsub.s32 0, %v472
    %v474 = vadd.s32 %v469, 1
    %vm475 = vcmp.gt.s32.totalorder %v474, 0
    %v476 = vsel %vm475, %v474, 0
    %v477 = vshrl.u32 %v476, 5
    %v478 = vand.u32 %v476, 31
    %v479 = vsub.s32 32, %v478
    %v480 = vshrl.u32 683565275, %v479
    %v481 = vshll.u32 683565275, %v478
    %v482 = vshrl.u32 2475754826, %v479
    %v483 = vor.u32 %v481, %v482
    %v484 = vshll.u32 2475754826, %v478
    %v485 = vshrl.u32 2131351028, %v479
    %v486 = vor.u32 %v484, %v485
    %v487 = vshll.u32 2131351028, %v478
    %v488 = vshrl.u32 2102212464, %v479
    %v489 = vor.u32 %v487, %v488
    %v490 = vshll.u32 2102212464, %v478
    %v491 = vshrl.u32 920167782, %v479
    %v492 = vor.u32 %v490, %v491
    %v493 = vshll.u32 920167782, %v478
    %v494 = vshrl.u32 1326507024, %v479
    %v495 = vor.u32 %v493, %v494
    %vm496 = vcmp.lt.s32.totalorder %v477, 1
    %vm497 = vcmp.lt.s32.totalorder %v477, 2
    %vm498 = vcmp.lt.s32.totalorder %v477, 3
    %vm499 = vcmp.lt.s32.totalorder %v477, 4
    %v500 = vsel %vm496, %v480, %v483
    %v501 = vsel %vm499, %v489, 2102212464
    %v502 = vsel %vm498, %v486, %v501
    %v503 = vsel %vm497, %v500, %v502
    %v504 = vsel %vm496, %v483, %v486
    %v505 = vsel %vm499, %v492, 920167782
    %v506 = vsel %vm498, %v489, %v505
    %v507 = vsel %vm497, %v504, %v506
    %v508 = vsel %vm496, %v486, %v489
    %v509 = vsel %vm499, %v495, 1326507024
    %v510 = vsel %vm498, %v492, %v509
    %v511 = vsel %vm497, %v508, %v510
    %v512 = vshll.u32 %v472, 8
    %v513 = vmul.u32.u64.compose %v512, %v511
    %v514 = vextract.low.u32 %v513
    %v515 = vextract.high.u32 %v513
    %v516 = vmul.u32.u64.compose %v512, %v507
    %v517 = vextract.low.u32 %v516
    %v518 = vextract.high.u32 %v516
    %v519 = vmul.u32 %v512, %v503
    %v520 = vadd.s32 %v515, %v517
    %vm521 = vc.u32 %v515, %v517
    %v522 = vadd.s32 %v518, 1
    %v523 = vsel %vm521, %v522, %v518
    %v524 = vadd.s32 %v519, %v523
    %v525 = vadd.s32 %v524, 536870912
    %v526 = vshrl.u32 %v525, 30
    %v527 = vshll.u32 %v526, 30
    %v528 = vsub.s32 %v524, %v527
    %vm529 = vcmp.lt.s32.totalorder %v528, 0
    %v530 = vsub.s32 0, %v528
    %v531 = vsel %vm529, %v530, %v528
    %v532 = vclz %v531
    %v533 = vsub.s32 %v532, 2
    %vm534 = vcmp.gt.s32.totalorder 0, %v533
    %v535 = vsel %vm534, 0, %v533
    %v536 = vsub.s32 32, %v535
    %v537 = vshll.u32 %v528, %v535
    %v538 = vshrl.u32 %v520, %v536
    %v539 = vor.u32 %v537, %v538
    %v540 = vsub.s32 4294967266, %v535
    %v541 = vadd.s32 %v540, 127
    %v542 = vshll.u32 %v541, 23
    %v543 = vor.u32 4788187, %v542
    %v544 = vand.u32 2147483647, %v543
    %v546 = vcvt.s32.f32 %v539
    %v547 = vmul.f32 %v546, %v544
    %v548 = vxor.u32 %v547, 2147483648
    %v549 = vsel %vm466, %v548, %v547
    %v550 = vsub.s32 4, %v526
    %v551 = vsel %vm466, %v550, %v526
    %v552 = vsel %vm465, %v357, %v549
    %v553 = vsel %vm465, 0, %v551
    %v554 = vcosq.f32.pop %v552
    %v555 = vsinq.f32.pop %v552
    %vm556 = vweird.f32 %v357
    %v557 = vand.u32 %v553, 3
    %vm558 = vcmp.lt.s32.totalorder %v557, 2
    %vm559 = vcmp.eq.s32.totalorder %v557, 0
    %v560 = vxor.u32 %v555, 2147483648
    %v561 = vsel %vm559, %v554, %v560
    %vm562 = vcmp.eq.s32.totalorder %v557, 2
    %v563 = vxor.u32 %v554, 2147483648
    %v564 = vsel %vm562, %v563, %v555
    %v565 = vsel %vm558, %v561, %v564
    %v566 = vsel %vm556, nan, %v565
    %v567 = vld [vmem:[#allocation11] sm:$0xff]
    %v568 = vld [vmem:[#allocation11 + $0x8] sm:$0xff]
    %vm569 = vcmask 130048
    %v571 = vsel %vm569, %v566, 0
    %573 = vmatprep.subr.mxu0 0.0
    %574 = vmatpush1.msra.mxu0 0.0
    %575 = vmatprep.subr.mxu0 0.0
    %576 = vmatpush1.msra.mxu0 0.0
    %577 = vmatprep.subr.mxu0 0.0
    %578 = vmatpush1.msra.mxu0 0.0
    %579 = vmatprep.subr.mxu0 0.0
    %580 = vmatpush1.msra.mxu0 0.0
    %581 = vmatprep.subr.mxu0 0.0
    %582 = vmatpush1.msra.mxu0 0.0
    %583 = vmatprep.subr.mxu0 0.0
    %584 = vmatpush1.msra.mxu0 0.0
    %585 = vmatprep.subr.mxu0 0.0
    %586 = vmatpush1.msra.mxu0 0.0
    %587 = vmatprep.subr.mxu0 0.0
    %588 = vmatpush1.msra.mxu0 0.0
    %589 = vmatprep.subr.mxu0 0.0
    %590 = vmatpush1.msra.mxu0 0.0
    %591 = vmatprep.subr.mxu0 0.0
    %592 = vmatpush1.msra.mxu0 0.0
    %593 = vmatprep.subr.mxu0 0.0
    %594 = vmatpush1.msra.mxu0 0.0
    %595 = vmatprep.subr.mxu0 0.0
    %596 = vmatpush1.msra.mxu0 0.0
    %597 = vmatprep.subr.mxu0 0.0
    %598 = vmatpush1.msra.mxu0 0.0
    %599 = vmatprep.subr.mxu0 0.0
    %600 = vmatpush1.msra.mxu0 0.0
    %601 = vmatprep.subr.mxu0 0.0
    %602 = vmatpush1.msra.mxu0 %v568
    %603 = vmatprep.subr.mxu0 0.0
    %604 = vmatpush1.msra.mxu0 %v567
    %605 = vmatprep.subr.mxu0 0.0
    %606 = vmatpush2.msra.mxu0 0.0
    %607 = vmatprep.subr.mxu0 0.0
    %608 = vmatpush2.msra.mxu0 0.0
    %609 = vmatprep.subr.mxu0 0.0
    %610 = vmatpush2.msra.mxu0 0.0
    %611 = vmatprep.subr.mxu0 0.0
    %612 = vmatpush2.msra.mxu0 0.0
    %613 = vmatprep.subr.mxu0 0.0
    %614 = vmatpush2.msra.mxu0 0.0
    %615 = vmatprep.subr.mxu0 0.0
    %616 = vmatpush2.msra.mxu0 0.0
    %617 = vmatprep.subr.mxu0 0.0
    %618 = vmatpush2.msra.mxu0 0.0
    %619 = vmatprep.subr.mxu0 0.0
    %620 = vmatpush2.msra.mxu0 0.0
    %621 = vmatprep.subr.mxu0 0.0
    %622 = vmatpush2.msra.mxu0 0.0
    %623 = vmatprep.subr.mxu0 0.0
    %624 = vmatpush2.msra.mxu0 0.0
    %625 = vmatprep.subr.mxu0 0.0
    %626 = vmatpush2.msra.mxu0 0.0
    %627 = vmatprep.subr.mxu0 0.0
    %628 = vmatpush2.msra.mxu0 0.0
    %629 = vmatprep.subr.mxu0 0.0
    %630 = vmatpush2.msra.mxu0 0.0
    %631 = vmatprep.subr.mxu0 0.0
    %632 = vmatpush2.msra.mxu0 0.0
    %633 = vmatprep.subr.mxu0 0.0
    %634 = vmatpush2.msra.mxu0 0.0
    %635 = vmatprep.subr.mxu0 0.0
    %636 = vmatpush2.msra.mxu0 0.0
    %637 = vmatprep.mubr.f32.mxu0 0.0
    %638 = vmatmul.mubr.f32.gmra.mxu0 %v571
    %v639 = vpop.f32.mrf.mxu0
    %v640 = vadd.f32 0.0, %v639
    %v641 = vpop.f32.mrf.mxu0
    %642 = vdwg.mxu0
    %v644 = vsel %vm569, %v461, 0
    %646 = vmatprep.subr.mxu0 0.0
    %647 = vmatpush1.msra.mxu0 0.0
    %648 = vmatprep.subr.mxu0 0.0
    %649 = vmatpush1.msra.mxu0 0.0
    %650 = vmatprep.subr.mxu0 0.0
    %651 = vmatpush1.msra.mxu0 0.0
    %652 = vmatprep.subr.mxu0 0.0
    %653 = vmatpush1.msra.mxu0 0.0
    %654 = vmatprep.subr.mxu0 0.0
    %655 = vmatpush1.msra.mxu0 0.0
    %656 = vmatprep.subr.mxu0 0.0
    %657 = vmatpush1.msra.mxu0 0.0
    %658 = vmatprep.subr.mxu0 0.0
    %659 = vmatpush1.msra.mxu0 0.0
    %660 = vmatprep.subr.mxu0 0.0
    %661 = vmatpush1.msra.mxu0 0.0
    %662 = vmatprep.subr.mxu0 0.0
    %663 = vmatpush1.msra.mxu0 0.0
    %664 = vmatprep.subr.mxu0 0.0
    %665 = vmatpush1.msra.mxu0 0.0
    %666 = vmatprep.subr.mxu0 0.0
    %667 = vmatpush1.msra.mxu0 0.0
    %668 = vmatprep.subr.mxu0 0.0
    %669 = vmatpush1.msra.mxu0 0.0
    %670 = vmatprep.subr.mxu0 0.0
    %671 = vmatpush1.msra.mxu0 0.0
    %672 = vmatprep.subr.mxu0 0.0
    %673 = vmatpush1.msra.mxu0 0.0
    %674 = vmatprep.subr.mxu0 0.0
    %675 = vmatpush1.msra.mxu0 %v463
    %676 = vmatprep.subr.mxu0 0.0
    %677 = vmatpush1.msra.mxu0 %v462
    %678 = vmatprep.subr.mxu0 0.0
    %679 = vmatpush2.msra.mxu0 0.0
    %680 = vmatprep.subr.mxu0 0.0
    %681 = vmatpush2.msra.mxu0 0.0
    %682 = vmatprep.subr.mxu0 0.0
    %683 = vmatpush2.msra.mxu0 0.0
    %684 = vmatprep.subr.mxu0 0.0
    %685 = vmatpush2.msra.mxu0 0.0
    %686 = vmatprep.subr.mxu0 0.0
    %687 = vmatpush2.msra.mxu0 0.0
    %688 = vmatprep.subr.mxu0 0.0
    %689 = vmatpush2.msra.mxu0 0.0
    %690 = vmatprep.subr.mxu0 0.0
    %691 = vmatpush2.msra.mxu0 0.0
    %692 = vmatprep.subr.mxu0 0.0
    %693 = vmatpush2.msra.mxu0 0.0
    %694 = vmatprep.subr.mxu0 0.0
    %695 = vmatpush2.msra.mxu0 0.0
    %696 = vmatprep.subr.mxu0 0.0
    %697 = vmatpush2.msra.mxu0 0.0
    %698 = vmatprep.subr.mxu0 0.0
    %699 = vmatpush2.msra.mxu0 0.0
    %700 = vmatprep.subr.mxu0 0.0
    %701 = vmatpush2.msra.mxu0 0.0
    %702 = vmatprep.subr.mxu0 0.0
    %703 = vmatpush2.msra.mxu0 0.0
    %704 = vmatprep.subr.mxu0 0.0
    %705 = vmatpush2.msra.mxu0 0.0
    %706 = vmatprep.subr.mxu0 0.0
    %707 = vmatpush2.msra.mxu0 0.0
    %708 = vmatprep.subr.mxu0 0.0
    %709 = vmatpush2.msra.mxu0 0.0
    %710 = vmatprep.mubr.f32.mxu0 0.0
    %711 = vmatmul.mubr.f32.gmra.mxu0 %v644
    %v712 = vpop.f32.mrf.mxu0
    %v713 = vadd.f32 %v640, %v712
    %v714 = vpop.f32.mrf.mxu0
    %715 = vdwg.mxu0
    %v716 = vld [vmem:[#allocation12] sm:$0x1]
    %v718 = vlaneseq
    %v719 = vshrl.u32 %v718, 7
    %v720 = vsub.s32 0, %v719
    %v721 = vrot.slane %v716, %v720
    %v723 = vadd.f32 %v713, %v721
    %v724 = vld [vmem:[%s25] sm:$0xff]
    %v725 = vld [vmem:[%s25 + $0x8] sm:$0xff]
    %v726 = vld [vmem:[%s25 + $0x10] sm:$0xff]
    %v727 = vld [vmem:[%s25 + $0x18] sm:$0xff]
    %v728 = vld [vmem:[#allocation2] sm:$0x1]
    %v730 = vlaneseq
    %v731 = vshrl.u32 %v730, 7
    %v732 = vsub.s32 0, %v731
    %v733 = vrot.slane %v728, %v732
    %vm735 = vcmask 261120
    %v737 = vsel %vm735, %v723, 0
    %739 = vmatprep.subr.mxu0 0.0
    %740 = vmatpush1.msra.mxu0 0.0
    %741 = vmatprep.subr.mxu0 0.0
    %742 = vmatpush1.msra.mxu0 0.0
    %743 = vmatprep.subr.mxu0 0.0
    %744 = vmatpush1.msra.mxu0 0.0
    %745 = vmatprep.subr.mxu0 0.0
    %746 = vmatpush1.msra.mxu0 0.0
    %747 = vmatprep.subr.mxu0 0.0
    %748 = vmatpush1.msra.mxu0 0.0
    %749 = vmatprep.subr.mxu0 0.0
    %750 = vmatpush1.msra.mxu0 0.0
    %751 = vmatprep.subr.mxu0 0.0
    %752 = vmatpush1.msra.mxu0 0.0
    %753 = vmatprep.subr.mxu0 0.0
    %754 = vmatpush1.msra.mxu0 0.0
    %755 = vmatprep.subr.mxu0 0.0
    %756 = vmatpush1.msra.mxu0 0.0
    %757 = vmatprep.subr.mxu0 0.0
    %758 = vmatpush1.msra.mxu0 0.0
    %759 = vmatprep.subr.mxu0 0.0
    %760 = vmatpush1.msra.mxu0 0.0
    %761 = vmatprep.subr.mxu0 0.0
    %762 = vmatpush1.msra.mxu0 0.0
    %763 = vmatprep.subr.mxu0 0.0
    %764 = vmatpush1.msra.mxu0 %v727
    %765 = vmatprep.subr.mxu0 0.0
    %766 = vmatpush1.msra.mxu0 %v726
    %767 = vmatprep.subr.mxu0 0.0
    %768 = vmatpush1.msra.mxu0 %v725
    %769 = vmatprep.subr.mxu0 0.0
    %770 = vmatpush1.msra.mxu0 %v724
    %771 = vmatprep.subr.mxu0 0.0
    %772 = vmatpush2.msra.mxu0 0.0
    %773 = vmatprep.subr.mxu0 0.0
    %774 = vmatpush2.msra.mxu0 0.0
    %775 = vmatprep.subr.mxu0 0.0
    %776 = vmatpush2.msra.mxu0 0.0
    %777 = vmatprep.subr.mxu0 0.0
    %778 = vmatpush2.msra.mxu0 0.0
    %779 = vmatprep.subr.mxu0 0.0
    %780 = vmatpush2.msra.mxu0 0.0
    %781 = vmatprep.subr.mxu0 0.0
    %782 = vmatpush2.msra.mxu0 0.0
    %783 = vmatprep.subr.mxu0 0.0
    %784 = vmatpush2.msra.mxu0 0.0
    %785 = vmatprep.subr.mxu0 0.0
    %786 = vmatpush2.msra.mxu0 0.0
    %787 = vmatprep.subr.mxu0 0.0
    %788 = vmatpush2.msra.mxu0 0.0
    %789 = vmatprep.subr.mxu0 0.0
    %790 = vmatpush2.msra.mxu0 0.0
    %791 = vmatprep.subr.mxu0 0.0
    %792 = vmatpush2.msra.mxu0 0.0
    %793 = vmatprep.subr.mxu0 0.0
    %794 = vmatpush2.msra.mxu0 0.0
    %795 = vmatprep.subr.mxu0 0.0
    %796 = vmatpush2.msra.mxu0 0.0
    %797 = vmatprep.subr.mxu0 0.0
    %798 = vmatpush2.msra.mxu0 0.0
    %799 = vmatprep.subr.mxu0 0.0
    %800 = vmatpush2.msra.mxu0 0.0
    %801 = vmatprep.subr.mxu0 0.0
    %802 = vmatpush2.msra.mxu0 0.0
    %803 = vmatprep.mubr.f32.mxu0 0.0
    %804 = vmatmul.mubr.f32.gmra.mxu0 %v737
    %v805 = vpop.f32.mrf.mxu0
    %v806 = vadd.f32 %v733, %v805
    %v807 = vpop.f32.mrf.mxu0
    %808 = vdwg.mxu0
    %v809 = vmul.f32 %v277, 2.0
    %v810 = vmul.f32 %v809, 3.218876
    %v811 = vmul.f32 %v810, 1.442695
    %v812 = vpow.pop %v811
    %v813 = vsub.f32 %v812, 1.0
    %v814 = vrcp.pop 6.437752
    %v815 = vmul.f32 %v813, %v814
    %v816 = vrsqrt.pop %v815
    %v817 = vmul.f32 %v815, %v816
    %vm818 = vcmp.eq.f32.partialorder %v815, inf
    %v819 = vsel %vm818, %v815, %v817
    %vm820 = vcmp.eq.f32.partialorder %v815, 0.0
    %v821 = vand.u32 %v815, 2147483648
    %v822 = vsel %vm820, %v821, %v819
    %v823 = vlaneseq
    %v824 = vand.u32 %v823, 127
    %v825 = vld [vmem:[%s9] sm:$0xff]
    %v826 = vld [vmem:[%s9 + $0x8] sm:$0xff]
    %827 = vset.pattern.permute.xlu0 0
    %828 = vperm.xlu0 %827, %v825
    %v829 = vpop.permute.xlu0 %828
    %830 = vset.pattern.permute.xlu0 0
    %831 = vperm.xlu0 %830, %v826
    %v832 = vpop.permute.xlu0 %831
    %vm833 = vcmp.eq.s32.totalorder %v829, %v824
    %vm834 = vcmp.eq.s32.totalorder %v832, %v824
    %v835 = vsel %vm833, 1, 0
    %v836 = vsel %vm834, 1, 0
    %v837 = vcvt.s32.f32 %v835
    %v838 = vcvt.s32.f32 %v836
    %v839 = vld [vmem:[%s11] sm:$0xff]
    %v840 = vld [vmem:[%s11 + $0x8] sm:$0xff]
    %841 = vset.pattern.permute.xlu0 0
    %842 = vperm.xlu0 %841, %v839
    %v843 = vpop.permute.xlu0 %842
    %844 = vset.pattern.permute.xlu0 0
    %845 = vperm.xlu0 %844, %v840
    %v846 = vpop.permute.xlu0 %845
    %vm847 = vcmp.eq.s32.totalorder %v843, %v824
    %vm848 = vcmp.eq.s32.totalorder %v846, %v824
    %v849 = vsel %vm847, 1, 0
    %v850 = vsel %vm848, 1, 0
    %v851 = vcvt.s32.f32 %v849
    %v852 = vcvt.s32.f32 %v850
    %v853 = vld [vmem:[%s13] sm:$0x1]
    %v854 = vlaneseq
    %v855 = vshrl.u32 %v854, 7
    %v856 = vlaneseq
    %v857 = vshrl.u32 %v856, 7
    %v858 = vsub.s32 0, %v857
    %v859 = vrot.slane %v853, %v858
    %vm860 = vcmp.eq.s32.totalorder %v859, %v855
    %v861 = vsel %vm860, 1, 0
    %v862 = vcvt.s32.f32 %v861
    %v863 = vld [vmem:[%s15] sm:$0xff]
    %v864 = vld [vmem:[%s15 + $0x8] sm:$0xff]
    %865 = vset.pattern.permute.xlu0 0
    %866 = vperm.xlu0 %865, %v863
    %v867 = vpop.permute.xlu0 %866
    %868 = vset.pattern.permute.xlu0 0
    %869 = vperm.xlu0 %868, %v864
    %v870 = vpop.permute.xlu0 %869
    %vm871 = vcmp.eq.s32.totalorder %v867, %v824
    %vm872 = vcmp.eq.s32.totalorder %v870, %v824
    %v873 = vsel %vm871, 1, 0
    %v874 = vsel %vm872, 1, 0
    %v875 = vcvt.s32.f32 %v873
    %v876 = vcvt.s32.f32 %v874
    %v877 = vld [vmem:[%s5] sm:$0xff]
    %v878 = vld [vmem:[%s5 + $0x8] sm:$0xff]
    %v879 = vld [vmem:[#allocation14] sm:$0x1]
    %v880 = vld [vmem:[#allocation15] sm:$0x1]
    %v882 = vlaneseq
    %v883 = vshrl.u32 %v882, 7
    %v884 = vsub.s32 0, %v883
    %v885 = vrot.slane %v880, %v884
    %v888 = vsel %vm279, %v877, 0
    %v891 = vsel %vm279, %v878, 0
    %v894 = vsel %vm283, %v879, 0
    %896 = vmatprep.subr.mxu0 0.0
    %897 = vmatpush1.msra.mxu0 0.0
    %898 = vmatprep.subr.mxu0 0.0
    %899 = vmatpush1.msra.mxu0 0.0
    %900 = vmatprep.subr.mxu0 0.0
    %901 = vmatpush1.msra.mxu0 0.0
    %902 = vmatprep.subr.mxu0 0.0
    %903 = vmatpush1.msra.mxu0 0.0
    %904 = vmatprep.subr.mxu0 0.0
    %905 = vmatpush1.msra.mxu0 0.0
    %906 = vmatprep.subr.mxu0 0.0
    %907 = vmatpush1.msra.mxu0 0.0
    %908 = vmatprep.subr.mxu0 0.0
    %909 = vmatpush1.msra.mxu0 0.0
    %910 = vmatprep.subr.mxu0 0.0
    %911 = vmatpush1.msra.mxu0 0.0
    %912 = vmatprep.subr.mxu0 0.0
    %913 = vmatpush1.msra.mxu0 0.0
    %914 = vmatprep.subr.mxu0 0.0
    %915 = vmatpush1.msra.mxu0 0.0
    %916 = vmatprep.subr.mxu0 0.0
    %917 = vmatpush1.msra.mxu0 0.0
    %918 = vmatprep.subr.mxu0 0.0
    %919 = vmatpush1.msra.mxu0 0.0
    %920 = vmatprep.subr.mxu0 0.0
    %921 = vmatpush1.msra.mxu0 0.0
    %922 = vmatprep.subr.mxu0 0.0
    %923 = vmatpush1.msra.mxu0 0.0
    %924 = vmatprep.subr.mxu0 0.0
    %925 = vmatpush1.msra.mxu0 0.0
    %926 = vmatprep.subr.mxu0 0.0
    %927 = vmatpush1.msra.mxu0 %v894
    %928 = vmatprep.subr.mxu0 0.0
    %929 = vmatpush2.msra.mxu0 0.0
    %930 = vmatprep.subr.mxu0 0.0
    %931 = vmatpush2.msra.mxu0 0.0
    %932 = vmatprep.subr.mxu0 0.0
    %933 = vmatpush2.msra.mxu0 0.0
    %934 = vmatprep.subr.mxu0 0.0
    %935 = vmatpush2.msra.mxu0 0.0
    %936 = vmatprep.subr.mxu0 0.0
    %937 = vmatpush2.msra.mxu0 0.0
    %938 = vmatprep.subr.mxu0 0.0
    %939 = vmatpush2.msra.mxu0 0.0
    %940 = vmatprep.subr.mxu0 0.0
    %941 = vmatpush2.msra.mxu0 0.0
    %942 = vmatprep.subr.mxu0 0.0
    %943 = vmatpush2.msra.mxu0 0.0
    %944 = vmatprep.subr.mxu0 0.0
    %945 = vmatpush2.msra.mxu0 0.0
    %946 = vmatprep.subr.mxu0 0.0
    %947 = vmatpush2.msra.mxu0 0.0
    %948 = vmatprep.subr.mxu0 0.0
    %949 = vmatpush2.msra.mxu0 0.0
    %950 = vmatprep.subr.mxu0 0.0
    %951 = vmatpush2.msra.mxu0 0.0
    %952 = vmatprep.subr.mxu0 0.0
    %953 = vmatpush2.msra.mxu0 0.0
    %954 = vmatprep.subr.mxu0 0.0
    %955 = vmatpush2.msra.mxu0 0.0
    %956 = vmatprep.subr.mxu0 0.0
    %957 = vmatpush2.msra.mxu0 0.0
    %958 = vmatprep.subr.mxu0 0.0
    %959 = vmatpush2.msra.mxu0 0.0
    %960 = vmatprep.mubr.f32.mxu0 0.0
    %961 = vmatmul.mubr.f32.gmra.mxu0 %v888
    %v962 = vpop.f32.mrf.mxu0
    %v963 = vadd.f32 %v885, %v962
    %v964 = vpop.f32.mrf.mxu0
    %965 = vmatprep.mubr.f32.mxu0 0.0
    %966 = vmatmul.mubr.f32.gmra.mxu0 %v891
    %v967 = vpop.f32.mrf.mxu0
    %v968 = vadd.f32 %v885, %v967
    %v969 = vpop.f32.mrf.mxu0
    %970 = vdwg.mxu0
    %v971 = vmax.f32 %v963, 0.0
    %v972 = vmax.f32 %v968, 0.0
    %v973 = vld [vmem:[%s33] sm:$0xff]
    %v974 = vld [vmem:[%s33 + $0x8] sm:$0xff]
    %v975 = vld [vmem:[%s33 + $0x10] sm:$0xff]
    %v976 = vld [vmem:[%s33 + $0x18] sm:$0xff]
    %v977 = vld [vmem:[#allocation17] sm:$0x1]
    %v979 = vlaneseq
    %v980 = vshrl.u32 %v979, 7
    %v981 = vsub.s32 0, %v980
    %v982 = vrot.slane %v977, %v981
    %v985 = vsel %vm735, %v971, 0
    %v988 = vsel %vm735, %v972, 0
    %990 = vmatprep.subr.mxu0 0.0
    %991 = vmatpush1.msra.mxu0 0.0
    %992 = vmatprep.subr.mxu0 0.0
    %993 = vmatpush1.msra.mxu0 0.0
    %994 = vmatprep.subr.mxu0 0.0
    %995 = vmatpush1.msra.mxu0 0.0
    %996 = vmatprep.subr.mxu0 0.0
    %997 = vmatpush1.msra.mxu0 0.0
    %998 = vmatprep.subr.mxu0 0.0
    %999 = vmatpush1.msra.mxu0 0.0
    %1000 = vmatprep.subr.mxu0 0.0
    %1001 = vmatpush1.msra.mxu0 0.0
    %1002 = vmatprep.subr.mxu0 0.0
    %1003 = vmatpush1.msra.mxu0 0.0
    %1004 = vmatprep.subr.mxu0 0.0
    %1005 = vmatpush1.msra.mxu0 0.0
    %1006 = vmatprep.subr.mxu0 0.0
    %1007 = vmatpush1.msra.mxu0 0.0
    %1008 = vmatprep.subr.mxu0 0.0
    %1009 = vmatpush1.msra.mxu0 0.0
    %1010 = vmatprep.subr.mxu0 0.0
    %1011 = vmatpush1.msra.mxu0 0.0
    %1012 = vmatprep.subr.mxu0 0.0
    %1013 = vmatpush1.msra.mxu0 0.0
    %1014 = vmatprep.subr.mxu0 0.0
    %1015 = vmatpush1.msra.mxu0 %v976
    %1016 = vmatprep.subr.mxu0 0.0
    %1017 = vmatpush1.msra.mxu0 %v975
    %1018 = vmatprep.subr.mxu0 0.0
    %1019 = vmatpush1.msra.mxu0 %v974
    %1020 = vmatprep.subr.mxu0 0.0
    %1021 = vmatpush1.msra.mxu0 %v973
    %1022 = vmatprep.subr.mxu0 0.0
    %1023 = vmatpush2.msra.mxu0 0.0
    %1024 = vmatprep.subr.mxu0 0.0
    %1025 = vmatpush2.msra.mxu0 0.0
    %1026 = vmatprep.subr.mxu0 0.0
    %1027 = vmatpush2.msra.mxu0 0.0
    %1028 = vmatprep.subr.mxu0 0.0
    %1029 = vmatpush2.msra.mxu0 0.0
    %1030 = vmatprep.subr.mxu0 0.0
    %1031 = vmatpush2.msra.mxu0 0.0
    %1032 = vmatprep.subr.mxu0 0.0
    %1033 = vmatpush2.msra.mxu0 0.0
    %1034 = vmatprep.subr.mxu0 0.0
    %1035 = vmatpush2.msra.mxu0 0.0
    %1036 = vmatprep.subr.mxu0 0.0
    %1037 = vmatpush2.msra.mxu0 0.0
    %1038 = vmatprep.subr.mxu0 0.0
    %1039 = vmatpush2.msra.mxu0 0.0
    %1040 = vmatprep.subr.mxu0 0.0
    %1041 = vmatpush2.msra.mxu0 0.0
    %1042 = vmatprep.subr.mxu0 0.0
    %1043 = vmatpush2.msra.mxu0 0.0
    %1044 = vmatprep.subr.mxu0 0.0
    %1045 = vmatpush2.msra.mxu0 0.0
    %1046 = vmatprep.subr.mxu0 0.0
    %1047 = vmatpush2.msra.mxu0 0.0
    %1048 = vmatprep.subr.mxu0 0.0
    %1049 = vmatpush2.msra.mxu0 0.0
    %1050 = vmatprep.subr.mxu0 0.0
    %1051 = vmatpush2.msra.mxu0 0.0
    %1052 = vmatprep.subr.mxu0 0.0
    %1053 = vmatpush2.msra.mxu0 0.0
    %1054 = vmatprep.mubr.f32.mxu0 0.0
    %1055 = vmatmul.mubr.f32.gmra.mxu0 %v985
    %v1056 = vpop.f32.mrf.mxu0
    %v1057 = vadd.f32 %v982, %v1056
    %v1058 = vpop.f32.mrf.mxu0
    %1059 = vmatprep.mubr.f32.mxu0 0.0
    %1060 = vmatmul.mubr.f32.gmra.mxu0 %v988
    %v1061 = vpop.f32.mrf.mxu0
    %v1062 = vadd.f32 %v982, %v1061
    %v1063 = vpop.f32.mrf.mxu0
    %1064 = vdwg.mxu0
    %vm1065 = vcmask 15360
    %v1067 = vsel %vm1065, %v875, 0
    %v1070 = vsel %vm1065, %v876, 0
    %vm1072 = vcmask 1041408
    %v1074 = vsel %vm1072, %v806, 0
    %1076 = vmatprep.subr.mxu0 0.0
    %1077 = vmatpush1.msra.mxu0 0.0
    %1078 = vmatprep.subr.mxu0 0.0
    %1079 = vmatpush1.msra.mxu0 0.0
    %1080 = vmatprep.subr.mxu0 0.0
    %1081 = vmatpush1.msra.mxu0 0.0
    %1082 = vmatprep.subr.mxu0 0.0
    %1083 = vmatpush1.msra.mxu0 0.0
    %1084 = vmatprep.subr.mxu0 0.0
    %1085 = vmatpush1.msra.mxu0 0.0
    %1086 = vmatprep.subr.mxu0 0.0
    %1087 = vmatpush1.msra.mxu0 0.0
    %1088 = vmatprep.subr.mxu0 0.0
    %1089 = vmatpush1.msra.mxu0 0.0
    %1090 = vmatprep.subr.mxu0 0.0
    %1091 = vmatpush1.msra.mxu0 0.0
    %1092 = vmatprep.subr.mxu0 0.0
    %1093 = vmatpush1.msra.mxu0 0.0
    %1094 = vmatprep.subr.mxu0 0.0
    %1095 = vmatpush1.msra.mxu0 0.0
    %1096 = vmatprep.subr.mxu0 0.0
    %1097 = vmatpush1.msra.mxu0 0.0
    %1098 = vmatprep.subr.mxu0 0.0
    %1099 = vmatpush1.msra.mxu0 0.0
    %1100 = vmatprep.subr.mxu0 0.0
    %1101 = vmatpush1.msra.mxu0 0.0
    %1102 = vmatprep.subr.mxu0 0.0
    %1103 = vmatpush1.msra.mxu0 0.0
    %1104 = vmatprep.subr.mxu0 0.0
    %1105 = vmatpush1.msra.mxu0 0.0
    %1106 = vmatprep.subr.mxu0 0.0
    %1107 = vmatpush1.msra.mxu0 %v1074
    %1108 = vmatprep.subr.mxu0 0.0
    %1109 = vmatpush2.msra.mxu0 0.0
    %1110 = vmatprep.subr.mxu0 0.0
    %1111 = vmatpush2.msra.mxu0 0.0
    %1112 = vmatprep.subr.mxu0 0.0
    %1113 = vmatpush2.msra.mxu0 0.0
    %1114 = vmatprep.subr.mxu0 0.0
    %1115 = vmatpush2.msra.mxu0 0.0
    %1116 = vmatprep.subr.mxu0 0.0
    %1117 = vmatpush2.msra.mxu0 0.0
    %1118 = vmatprep.subr.mxu0 0.0
    %1119 = vmatpush2.msra.mxu0 0.0
    %1120 = vmatprep.subr.mxu0 0.0
    %1121 = vmatpush2.msra.mxu0 0.0
    %1122 = vmatprep.subr.mxu0 0.0
    %1123 = vmatpush2.msra.mxu0 0.0
    %1124 = vmatprep.subr.mxu0 0.0
    %1125 = vmatpush2.msra.mxu0 0.0
    %1126 = vmatprep.subr.mxu0 0.0
    %1127 = vmatpush2.msra.mxu0 0.0
    %1128 = vmatprep.subr.mxu0 0.0
    %1129 = vmatpush2.msra.mxu0 0.0
    %1130 = vmatprep.subr.mxu0 0.0
    %1131 = vmatpush2.msra.mxu0 0.0
    %1132 = vmatprep.subr.mxu0 0.0
    %1133 = vmatpush2.msra.mxu0 0.0
    %1134 = vmatprep.subr.mxu0 0.0
    %1135 = vmatpush2.msra.mxu0 0.0
    %1136 = vmatprep.subr.mxu0 0.0
    %1137 = vmatpush2.msra.mxu0 0.0
    %1138 = vmatprep.subr.mxu0 0.0
    %1139 = vmatpush2.msra.mxu0 0.0
    %1140 = vmatprep.mubr.f32.mxu0 0.0
    %1141 = vmatmul.mubr.f32.gmra.mxu0 %v1067
    %v1142 = vpop.f32.mrf.mxu0
    %v1143 = vadd.f32 0.0, %v1142
    %v1144 = vpop.f32.mrf.mxu0
    %1145 = vmatprep.mubr.f32.mxu0 0.0
    %1146 = vmatmul.mubr.f32.gmra.mxu0 %v1070
    %v1147 = vpop.f32.mrf.mxu0
    %v1148 = vadd.f32 0.0, %v1147
    %v1149 = vpop.f32.mrf.mxu0
    %1150 = vdwg.mxu0
    %1152 = vset.pattern.permute.xlu0 0
    %1153 = vperm.xlu0 %1152, %v1143
    %v1154 = vpop.permute.xlu0 %1153
    %1157 = vset.pattern.permute.xlu0 0
    %1158 = vperm.xlu0 %1157, %v1148
    %v1159 = vpop.permute.xlu0 %1158
    %v1161 = vadd.f32 %v1057, %v1154
    %v1162 = vadd.f32 %v1062, %v1159
    %v1163 = vld [vmem:[#allocation6] sm:$0xff]
    %v1164 = vld [vmem:[#allocation6 + $0x8] sm:$0xff]
    %v1165 = vmul.f32 %v1161, %v1163
    %v1166 = vmul.f32 %v1162, %v1164
    %v1167 = vld [vmem:[#allocation4] sm:$0xff]
    %vm1168 = vcmask 64512
    %v1170 = vsel %vm1168, %v837, 0
    %v1173 = vsel %vm1168, %v838, 0
    %1175 = vmatprep.subr.mxu0 0.0
    %1176 = vmatpush1.msra.mxu0 0.0
    %1177 = vmatprep.subr.mxu0 0.0
    %1178 = vmatpush1.msra.mxu0 0.0
    %1179 = vmatprep.subr.mxu0 0.0
    %1180 = vmatpush1.msra.mxu0 0.0
    %1181 = vmatprep.subr.mxu0 0.0
    %1182 = vmatpush1.msra.mxu0 0.0
    %1183 = vmatprep.subr.mxu0 0.0
    %1184 = vmatpush1.msra.mxu0 0.0
    %1185 = vmatprep.subr.mxu0 0.0
    %1186 = vmatpush1.msra.mxu0 0.0
    %1187 = vmatprep.subr.mxu0 0.0
    %1188 = vmatpush1.msra.mxu0 0.0
    %1189 = vmatprep.subr.mxu0 0.0
    %1190 = vmatpush1.msra.mxu0 0.0
    %1191 = vmatprep.subr.mxu0 0.0
    %1192 = vmatpush1.msra.mxu0 0.0
    %1193 = vmatprep.subr.mxu0 0.0
    %1194 = vmatpush1.msra.mxu0 0.0
    %1195 = vmatprep.subr.mxu0 0.0
    %1196 = vmatpush1.msra.mxu0 0.0
    %1197 = vmatprep.subr.mxu0 0.0
    %1198 = vmatpush1.msra.mxu0 0.0
    %1199 = vmatprep.subr.mxu0 0.0
    %1200 = vmatpush1.msra.mxu0 0.0
    %1201 = vmatprep.subr.mxu0 0.0
    %1202 = vmatpush1.msra.mxu0 0.0
    %1203 = vmatprep.subr.mxu0 0.0
    %1204 = vmatpush1.msra.mxu0 0.0
    %1205 = vmatprep.subr.mxu0 0.0
    %1206 = vmatpush1.msra.mxu0 %v1167
    %1207 = vmatprep.subr.mxu0 0.0
    %1208 = vmatpush2.msra.mxu0 0.0
    %1209 = vmatprep.subr.mxu0 0.0
    %1210 = vmatpush2.msra.mxu0 0.0
    %1211 = vmatprep.subr.mxu0 0.0
    %1212 = vmatpush2.msra.mxu0 0.0
    %1213 = vmatprep.subr.mxu0 0.0
    %1214 = vmatpush2.msra.mxu0 0.0
    %1215 = vmatprep.subr.mxu0 0.0
    %1216 = vmatpush2.msra.mxu0 0.0
    %1217 = vmatprep.subr.mxu0 0.0
    %1218 = vmatpush2.msra.mxu0 0.0
    %1219 = vmatprep.subr.mxu0 0.0
    %1220 = vmatpush2.msra.mxu0 0.0
    %1221 = vmatprep.subr.mxu0 0.0
    %1222 = vmatpush2.msra.mxu0 0.0
    %1223 = vmatprep.subr.mxu0 0.0
    %1224 = vmatpush2.msra.mxu0 0.0
    %1225 = vmatprep.subr.mxu0 0.0
    %1226 = vmatpush2.msra.mxu0 0.0
    %1227 = vmatprep.subr.mxu0 0.0
    %1228 = vmatpush2.msra.mxu0 0.0
    %1229 = vmatprep.subr.mxu0 0.0
    %1230 = vmatpush2.msra.mxu0 0.0
    %1231 = vmatprep.subr.mxu0 0.0
    %1232 = vmatpush2.msra.mxu0 0.0
    %1233 = vmatprep.subr.mxu0 0.0
    %1234 = vmatpush2.msra.mxu0 0.0
    %1235 = vmatprep.subr.mxu0 0.0
    %1236 = vmatpush2.msra.mxu0 0.0
    %1237 = vmatprep.subr.mxu0 0.0
    %1238 = vmatpush2.msra.mxu0 0.0
    %1239 = vmatprep.mubr.f32.mxu0 0.0
    %1240 = vmatmul.mubr.f32.gmra.mxu0 %v1170
    %v1241 = vpop.f32.mrf.mxu0
    %v1242 = vadd.f32 %v1165, %v1241
    %v1243 = vpop.f32.mrf.mxu0
    %1244 = vmatprep.mubr.f32.mxu0 0.0
    %1245 = vmatmul.mubr.f32.gmra.mxu0 %v1173
    %v1246 = vpop.f32.mrf.mxu0
    %v1247 = vadd.f32 %v1166, %v1246
    %v1248 = vpop.f32.mrf.mxu0
    %1249 = vdwg.mxu0
    %v1250 = vmax.f32 %v1242, 0.0
    %v1251 = vmax.f32 %v1247, 0.0
    %v1253 = vsel %vm569, %v862, 0
    %1255 = vmatprep.subr.mxu0 0.0
    %1256 = vmatpush1.msra.mxu0 0.0
    %1257 = vmatprep.subr.mxu0 0.0
    %1258 = vmatpush1.msra.mxu0 0.0
    %1259 = vmatprep.subr.mxu0 0.0
    %1260 = vmatpush1.msra.mxu0 0.0
    %1261 = vmatprep.subr.mxu0 0.0
    %1262 = vmatpush1.msra.mxu0 0.0
    %1263 = vmatprep.subr.mxu0 0.0
    %1264 = vmatpush1.msra.mxu0 0.0
    %1265 = vmatprep.subr.mxu0 0.0
    %1266 = vmatpush1.msra.mxu0 0.0
    %1267 = vmatprep.subr.mxu0 0.0
    %1268 = vmatpush1.msra.mxu0 0.0
    %1269 = vmatprep.subr.mxu0 0.0
    %1270 = vmatpush1.msra.mxu0 0.0
    %1271 = vmatprep.subr.mxu0 0.0
    %1272 = vmatpush1.msra.mxu0 0.0
    %1273 = vmatprep.subr.mxu0 0.0
    %1274 = vmatpush1.msra.mxu0 0.0
    %1275 = vmatprep.subr.mxu0 0.0
    %1276 = vmatpush1.msra.mxu0 0.0
    %1277 = vmatprep.subr.mxu0 0.0
    %1278 = vmatpush1.msra.mxu0 0.0
    %1279 = vmatprep.subr.mxu0 0.0
    %1280 = vmatpush1.msra.mxu0 0.0
    %1281 = vmatprep.subr.mxu0 0.0
    %1282 = vmatpush1.msra.mxu0 0.0
    %1283 = vmatprep.subr.mxu0 0.0
    %1284 = vmatpush1.msra.mxu0 %v1251
    %1285 = vmatprep.subr.mxu0 0.0
    %1286 = vmatpush1.msra.mxu0 %v1250
    %1287 = vmatprep.subr.mxu0 0.0
    %1288 = vmatpush2.msra.mxu0 0.0
    %1289 = vmatprep.subr.mxu0 0.0
    %1290 = vmatpush2.msra.mxu0 0.0
    %1291 = vmatprep.subr.mxu0 0.0
    %1292 = vmatpush2.msra.mxu0 0.0
    %1293 = vmatprep.subr.mxu0 0.0
    %1294 = vmatpush2.msra.mxu0 0.0
    %1295 = vmatprep.subr.mxu0 0.0
    %1296 = vmatpush2.msra.mxu0 0.0
    %1297 = vmatprep.subr.mxu0 0.0
    %1298 = vmatpush2.msra.mxu0 0.0
    %1299 = vmatprep.subr.mxu0 0.0
    %1300 = vmatpush2.msra.mxu0 0.0
    %1301 = vmatprep.subr.mxu0 0.0
    %1302 = vmatpush2.msra.mxu0 0.0
    %1303 = vmatprep.subr.mxu0 0.0
    %1304 = vmatpush2.msra.mxu0 0.0
    %1305 = vmatprep.subr.mxu0 0.0
    %1306 = vmatpush2.msra.mxu0 0.0
    %1307 = vmatprep.subr.mxu0 0.0
    %1308 = vmatpush2.msra.mxu0 0.0
    %1309 = vmatprep.subr.mxu0 0.0
    %1310 = vmatpush2.msra.mxu0 0.0
    %1311 = vmatprep.subr.mxu0 0.0
    %1312 = vmatpush2.msra.mxu0 0.0
    %1313 = vmatprep.subr.mxu0 0.0
    %1314 = vmatpush2.msra.mxu0 0.0
    %1315 = vmatprep.subr.mxu0 0.0
    %1316 = vmatpush2.msra.mxu0 0.0
    %1317 = vmatprep.subr.mxu0 0.0
    %1318 = vmatpush2.msra.mxu0 0.0
    %1319 = vmatprep.mubr.f32.mxu0 0.0
    %1320 = vmatmul.mubr.f32.gmra.mxu0 %v1253
    %v1321 = vpop.f32.mrf.mxu0
    %v1322 = vadd.f32 %v1167, %v1321
    %v1323 = vpop.f32.mrf.mxu0
    %1324 = vdwg.mxu0
    %v1325 = vld [vmem:[%s37] sm:$0xff]
    %v1326 = vld [vmem:[%s37 + $0x8] sm:$0xff]
    %v1327 = vld [vmem:[%s37 + $0x10] sm:$0xff]
    %v1328 = vld [vmem:[%s37 + $0x18] sm:$0xff]
    %v1329 = vld [vmem:[#allocation18] sm:$0x1]
    %v1331 = vlaneseq
    %v1332 = vshrl.u32 %v1331, 7
    %v1333 = vsub.s32 0, %v1332
    %v1334 = vrot.slane %v1329, %v1333
    %v1337 = vsel %vm735, %v1322, 0
    %1339 = vmatprep.subr.mxu0 0.0
    %1340 = vmatpush1.msra.mxu0 0.0
    %1341 = vmatprep.subr.mxu0 0.0
    %1342 = vmatpush1.msra.mxu0 0.0
    %1343 = vmatprep.subr.mxu0 0.0
    %1344 = vmatpush1.msra.mxu0 0.0
    %1345 = vmatprep.subr.mxu0 0.0
    %1346 = vmatpush1.msra.mxu0 0.0
    %1347 = vmatprep.subr.mxu0 0.0
    %1348 = vmatpush1.msra.mxu0 0.0
    %1349 = vmatprep.subr.mxu0 0.0
    %1350 = vmatpush1.msra.mxu0 0.0
    %1351 = vmatprep.subr.mxu0 0.0
    %1352 = vmatpush1.msra.mxu0 0.0
    %1353 = vmatprep.subr.mxu0 0.0
    %1354 = vmatpush1.msra.mxu0 0.0
    %1355 = vmatprep.subr.mxu0 0.0
    %1356 = vmatpush1.msra.mxu0 0.0
    %1357 = vmatprep.subr.mxu0 0.0
    %1358 = vmatpush1.msra.mxu0 0.0
    %1359 = vmatprep.subr.mxu0 0.0
    %1360 = vmatpush1.msra.mxu0 0.0
    %1361 = vmatprep.subr.mxu0 0.0
    %1362 = vmatpush1.msra.mxu0 0.0
    %1363 = vmatprep.subr.mxu0 0.0
    %1364 = vmatpush1.msra.mxu0 %v1328
    %1365 = vmatprep.subr.mxu0 0.0
    %1366 = vmatpush1.msra.mxu0 %v1327
    %1367 = vmatprep.subr.mxu0 0.0
    %1368 = vmatpush1.msra.mxu0 %v1326
    %1369 = vmatprep.subr.mxu0 0.0
    %1370 = vmatpush1.msra.mxu0 %v1325
    %1371 = vmatprep.subr.mxu0 0.0
    %1372 = vmatpush2.msra.mxu0 0.0
    %1373 = vmatprep.subr.mxu0 0.0
    %1374 = vmatpush2.msra.mxu0 0.0
    %1375 = vmatprep.subr.mxu0 0.0
    %1376 = vmatpush2.msra.mxu0 0.0
    %1377 = vmatprep.subr.mxu0 0.0
    %1378 = vmatpush2.msra.mxu0 0.0
    %1379 = vmatprep.subr.mxu0 0.0
    %1380 = vmatpush2.msra.mxu0 0.0
    %1381 = vmatprep.subr.mxu0 0.0
    %1382 = vmatpush2.msra.mxu0 0.0
    %1383 = vmatprep.subr.mxu0 0.0
    %1384 = vmatpush2.msra.mxu0 0.0
    %1385 = vmatprep.subr.mxu0 0.0
    %1386 = vmatpush2.msra.mxu0 0.0
    %1387 = vmatprep.subr.mxu0 0.0
    %1388 = vmatpush2.msra.mxu0 0.0
    %1389 = vmatprep.subr.mxu0 0.0
    %1390 = vmatpush2.msra.mxu0 0.0
    %1391 = vmatprep.subr.mxu0 0.0
    %1392 = vmatpush2.msra.mxu0 0.0
    %1393 = vmatprep.subr.mxu0 0.0
    %1394 = vmatpush2.msra.mxu0 0.0
    %1395 = vmatprep.subr.mxu0 0.0
    %1396 = vmatpush2.msra.mxu0 0.0
    %1397 = vmatprep.subr.mxu0 0.0
    %1398 = vmatpush2.msra.mxu0 0.0
    %1399 = vmatprep.subr.mxu0 0.0
    %1400 = vmatpush2.msra.mxu0 0.0
    %1401 = vmatprep.subr.mxu0 0.0
    %1402 = vmatpush2.msra.mxu0 0.0
    %1403 = vmatprep.mubr.f32.mxu0 0.0
    %1404 = vmatmul.mubr.f32.gmra.mxu0 %v1337
    %v1405 = vpop.f32.mrf.mxu0
    %v1406 = vadd.f32 %v1334, %v1405
    %v1407 = vpop.f32.mrf.mxu0
    %1408 = vdwg.mxu0
    %v1409 = vmax.f32 %v1406, 0.0
    %v1410 = vld [vmem:[%s41] sm:$0xff]
    %v1411 = vld [vmem:[%s41 + $0x8] sm:$0xff]
    %v1412 = vld [vmem:[%s41 + $0x10] sm:$0xff]
    %v1413 = vld [vmem:[%s41 + $0x18] sm:$0xff]
    %v1414 = vld [vmem:[#allocation20] sm:$0x1]
    %v1416 = vlaneseq
    %v1417 = vshrl.u32 %v1416, 7
    %v1418 = vsub.s32 0, %v1417
    %v1419 = vrot.slane %v1414, %v1418
    %v1422 = vsel %vm735, %v1409, 0
    %1424 = vmatprep.subr.mxu0 0.0
    %1425 = vmatpush1.msra.mxu0 0.0
    %1426 = vmatprep.subr.mxu0 0.0
    %1427 = vmatpush1.msra.mxu0 0.0
    %1428 = vmatprep.subr.mxu0 0.0
    %1429 = vmatpush1.msra.mxu0 0.0
    %1430 = vmatprep.subr.mxu0 0.0
    %1431 = vmatpush1.msra.mxu0 0.0
    %1432 = vmatprep.subr.mxu0 0.0
    %1433 = vmatpush1.msra.mxu0 0.0
    %1434 = vmatprep.subr.mxu0 0.0
    %1435 = vmatpush1.msra.mxu0 0.0
    %1436 = vmatprep.subr.mxu0 0.0
    %1437 = vmatpush1.msra.mxu0 0.0
    %1438 = vmatprep.subr.mxu0 0.0
    %1439 = vmatpush1.msra.mxu0 0.0
    %1440 = vmatprep.subr.mxu0 0.0
    %1441 = vmatpush1.msra.mxu0 0.0
    %1442 = vmatprep.subr.mxu0 0.0
    %1443 = vmatpush1.msra.mxu0 0.0
    %1444 = vmatprep.subr.mxu0 0.0
    %1445 = vmatpush1.msra.mxu0 0.0
    %1446 = vmatprep.subr.mxu0 0.0
    %1447 = vmatpush1.msra.mxu0 0.0
    %1448 = vmatprep.subr.mxu0 0.0
    %1449 = vmatpush1.msra.mxu0 %v1413
    %1450 = vmatprep.subr.mxu0 0.0
    %1451 = vmatpush1.msra.mxu0 %v1412
    %1452 = vmatprep.subr.mxu0 0.0
    %1453 = vmatpush1.msra.mxu0 %v1411
    %1454 = vmatprep.subr.mxu0 0.0
    %1455 = vmatpush1.msra.mxu0 %v1410
    %1456 = vmatprep.subr.mxu0 0.0
    %1457 = vmatpush2.msra.mxu0 0.0
    %1458 = vmatprep.subr.mxu0 0.0
    %1459 = vmatpush2.msra.mxu0 0.0
    %1460 = vmatprep.subr.mxu0 0.0
    %1461 = vmatpush2.msra.mxu0 0.0
    %1462 = vmatprep.subr.mxu0 0.0
    %1463 = vmatpush2.msra.mxu0 0.0
    %1464 = vmatprep.subr.mxu0 0.0
    %1465 = vmatpush2.msra.mxu0 0.0
    %1466 = vmatprep.subr.mxu0 0.0
    %1467 = vmatpush2.msra.mxu0 0.0
    %1468 = vmatprep.subr.mxu0 0.0
    %1469 = vmatpush2.msra.mxu0 0.0
    %1470 = vmatprep.subr.mxu0 0.0
    %1471 = vmatpush2.msra.mxu0 0.0
    %1472 = vmatprep.subr.mxu0 0.0
    %1473 = vmatpush2.msra.mxu0 0.0
    %1474 = vmatprep.subr.mxu0 0.0
    %1475 = vmatpush2.msra.mxu0 0.0
    %1476 = vmatprep.subr.mxu0 0.0
    %1477 = vmatpush2.msra.mxu0 0.0
    %1478 = vmatprep.subr.mxu0 0.0
    %1479 = vmatpush2.msra.mxu0 0.0
    %1480 = vmatprep.subr.mxu0 0.0
    %1481 = vmatpush2.msra.mxu0 0.0
    %1482 = vmatprep.subr.mxu0 0.0
    %1483 = vmatpush2.msra.mxu0 0.0
    %1484 = vmatprep.subr.mxu0 0.0
    %1485 = vmatpush2.msra.mxu0 0.0
    %1486 = vmatprep.subr.mxu0 0.0
    %1487 = vmatpush2.msra.mxu0 0.0
    %1488 = vmatprep.mubr.f32.mxu0 0.0
    %1489 = vmatmul.mubr.f32.gmra.mxu0 %v1422
    %v1490 = vpop.f32.mrf.mxu0
    %v1491 = vadd.f32 %v1419, %v1490
    %v1492 = vpop.f32.mrf.mxu0
    %1493 = vdwg.mxu0
    %v1494 = vmax.f32 %v1491, 0.0
    %v1495 = vadd.f32 %v1494, %v1167
    %1496 = vmatprep.subr.mxu0 0.0
    %1497 = vmatpush1.msra.mxu0 0.0
    %1498 = vmatprep.subr.mxu0 0.0
    %1499 = vmatpush1.msra.mxu0 0.0
    %1500 = vmatprep.subr.mxu0 0.0
    %1501 = vmatpush1.msra.mxu0 0.0
    %1502 = vmatprep.subr.mxu0 0.0
    %1503 = vmatpush1.msra.mxu0 0.0
    %1504 = vmatprep.subr.mxu0 0.0
    %1505 = vmatpush1.msra.mxu0 0.0
    %1506 = vmatprep.subr.mxu0 0.0
    %1507 = vmatpush1.msra.mxu0 0.0
    %1508 = vmatprep.subr.mxu0 0.0
    %1509 = vmatpush1.msra.mxu0 0.0
    %1510 = vmatprep.subr.mxu0 0.0
    %1511 = vmatpush1.msra.mxu0 0.0
    %1512 = vmatprep.subr.mxu0 0.0
    %1513 = vmatpush1.msra.mxu0 0.0
    %1514 = vmatprep.subr.mxu0 0.0
    %1515 = vmatpush1.msra.mxu0 0.0
    %1516 = vmatprep.subr.mxu0 0.0
    %1517 = vmatpush1.msra.mxu0 0.0
    %1518 = vmatprep.subr.mxu0 0.0
    %1519 = vmatpush1.msra.mxu0 0.0
    %1520 = vmatprep.subr.mxu0 0.0
    %1521 = vmatpush1.msra.mxu0 0.0
    %1522 = vmatprep.subr.mxu0 0.0
    %1523 = vmatpush1.msra.mxu0 0.0
    %1524 = vmatprep.subr.mxu0 0.0
    %1525 = vmatpush1.msra.mxu0 0.0
    %1526 = vmatprep.subr.mxu0 0.0
    %1527 = vmatpush1.msra.mxu0 %v1495
    %1528 = vmatprep.subr.mxu0 0.0
    %1529 = vmatpush2.msra.mxu0 0.0
    %1530 = vmatprep.subr.mxu0 0.0
    %1531 = vmatpush2.msra.mxu0 0.0
    %1532 = vmatprep.subr.mxu0 0.0
    %1533 = vmatpush2.msra.mxu0 0.0
    %1534 = vmatprep.subr.mxu0 0.0
    %1535 = vmatpush2.msra.mxu0 0.0
    %1536 = vmatprep.subr.mxu0 0.0
    %1537 = vmatpush2.msra.mxu0 0.0
    %1538 = vmatprep.subr.mxu0 0.0
    %1539 = vmatpush2.msra.mxu0 0.0
    %1540 = vmatprep.subr.mxu0 0.0
    %1541 = vmatpush2.msra.mxu0 0.0
    %1542 = vmatprep.subr.mxu0 0.0
    %1543 = vmatpush2.msra.mxu0 0.0
    %1544 = vmatprep.subr.mxu0 0.0
    %1545 = vmatpush2.msra.mxu0 0.0
    %1546 = vmatprep.subr.mxu0 0.0
    %1547 = vmatpush2.msra.mxu0 0.0
    %1548 = vmatprep.subr.mxu0 0.0
    %1549 = vmatpush2.msra.mxu0 0.0
    %1550 = vmatprep.subr.mxu0 0.0
    %1551 = vmatpush2.msra.mxu0 0.0
    %1552 = vmatprep.subr.mxu0 0.0
    %1553 = vmatpush2.msra.mxu0 0.0
    %1554 = vmatprep.subr.mxu0 0.0
    %1555 = vmatpush2.msra.mxu0 0.0
    %1556 = vmatprep.subr.mxu0 0.0
    %1557 = vmatpush2.msra.mxu0 0.0
    %1558 = vmatprep.subr.mxu0 0.0
    %1559 = vmatpush2.msra.mxu0 0.0
    %1560 = vmatprep.mubr.f32.mxu0 0.0
    %1561 = vmatmul.mubr.f32.gmra.mxu0 %v1170
    %v1562 = vpop.f32.mrf.mxu0
    %v1563 = vadd.f32 %v1165, %v1562
    %v1564 = vpop.f32.mrf.mxu0
    %1565 = vmatprep.mubr.f32.mxu0 0.0
    %1566 = vmatmul.mubr.f32.gmra.mxu0 %v1173
    %v1567 = vpop.f32.mrf.mxu0
    %v1568 = vadd.f32 %v1166, %v1567
    %v1569 = vpop.f32.mrf.mxu0
    %1570 = vdwg.mxu0
    %v1571 = vmax.f32 %v1563, 0.0
    %v1572 = vmax.f32 %v1568, 0.0
    %1573 = vmatprep.subr.mxu0 0.0
    %1574 = vmatpush1.msra.mxu0 0.0
    %1575 = vmatprep.subr.mxu0 0.0
    %1576 = vmatpush1.msra.mxu0 0.0
    %1577 = vmatprep.subr.mxu0 0.0
    %1578 = vmatpush1.msra.mxu0 0.0
    %1579 = vmatprep.subr.mxu0 0.0
    %1580 = vmatpush1.msra.mxu0 0.0
    %1581 = vmatprep.subr.mxu0 0.0
    %1582 = vmatpush1.msra.mxu0 0.0
    %1583 = vmatprep.subr.mxu0 0.0
    %1584 = vmatpush1.msra.mxu0 0.0
    %1585 = vmatprep.subr.mxu0 0.0
    %1586 = vmatpush1.msra.mxu0 0.0
    %1587 = vmatprep.subr.mxu0 0.0
    %1588 = vmatpush1.msra.mxu0 0.0
    %1589 = vmatprep.subr.mxu0 0.0
    %1590 = vmatpush1.msra.mxu0 0.0
    %1591 = vmatprep.subr.mxu0 0.0
    %1592 = vmatpush1.msra.mxu0 0.0
    %1593 = vmatprep.subr.mxu0 0.0
    %1594 = vmatpush1.msra.mxu0 0.0
    %1595 = vmatprep.subr.mxu0 0.0
    %1596 = vmatpush1.msra.mxu0 0.0
    %1597 = vmatprep.subr.mxu0 0.0
    %1598 = vmatpush1.msra.mxu0 0.0
    %1599 = vmatprep.subr.mxu0 0.0
    %1600 = vmatpush1.msra.mxu0 0.0
    %1601 = vmatprep.subr.mxu0 0.0
    %1602 = vmatpush1.msra.mxu0 %v1572
    %1603 = vmatprep.subr.mxu0 0.0
    %1604 = vmatpush1.msra.mxu0 %v1571
    %1605 = vmatprep.subr.mxu0 0.0
    %1606 = vmatpush2.msra.mxu0 0.0
    %1607 = vmatprep.subr.mxu0 0.0
    %1608 = vmatpush2.msra.mxu0 0.0
    %1609 = vmatprep.subr.mxu0 0.0
    %1610 = vmatpush2.msra.mxu0 0.0
    %1611 = vmatprep.subr.mxu0 0.0
    %1612 = vmatpush2.msra.mxu0 0.0
    %1613 = vmatprep.subr.mxu0 0.0
    %1614 = vmatpush2.msra.mxu0 0.0
    %1615 = vmatprep.subr.mxu0 0.0
    %1616 = vmatpush2.msra.mxu0 0.0
    %1617 = vmatprep.subr.mxu0 0.0
    %1618 = vmatpush2.msra.mxu0 0.0
    %1619 = vmatprep.subr.mxu0 0.0
    %1620 = vmatpush2.msra.mxu0 0.0
    %1621 = vmatprep.subr.mxu0 0.0
    %1622 = vmatpush2.msra.mxu0 0.0
    %1623 = vmatprep.subr.mxu0 0.0
    %1624 = vmatpush2.msra.mxu0 0.0
    %1625 = vmatprep.subr.mxu0 0.0
    %1626 = vmatpush2.msra.mxu0 0.0
    %1627 = vmatprep.subr.mxu0 0.0
    %1628 = vmatpush2.msra.mxu0 0.0
    %1629 = vmatprep.subr.mxu0 0.0
    %1630 = vmatpush2.msra.mxu0 0.0
    %1631 = vmatprep.subr.mxu0 0.0
    %1632 = vmatpush2.msra.mxu0 0.0
    %1633 = vmatprep.subr.mxu0 0.0
    %1634 = vmatpush2.msra.mxu0 0.0
    %1635 = vmatprep.subr.mxu0 0.0
    %1636 = vmatpush2.msra.mxu0 0.0
    %1637 = vmatprep.mubr.f32.mxu0 0.0
    %1638 = vmatmul.mubr.f32.gmra.mxu0 %v1253
    %v1639 = vpop.f32.mrf.mxu0
    %v1640 = vadd.f32 %v1495, %v1639
    %v1641 = vpop.f32.mrf.mxu0
    %1642 = vdwg.mxu0
    %s1643 = scalar_lea.vmem %s37, 32
    %v1644 = vld [vmem:[%s1643] sm:$0xff]
    %v1645 = vld [vmem:[%s1643 + $0x8] sm:$0xff]
    %v1646 = vld [vmem:[%s1643 + $0x10] sm:$0xff]
    %v1647 = vld [vmem:[%s1643 + $0x18] sm:$0xff]
    %s1648 = scalar_lea.vmem [#allocation18], 1
    %v1649 = vld [vmem:[%s1648] sm:$0x1]
    %v1651 = vlaneseq
    %v1652 = vshrl.u32 %v1651, 7
    %v1653 = vsub.s32 0, %v1652
    %v1654 = vrot.slane %v1649, %v1653
    %v1657 = vsel %vm735, %v1640, 0
    %1659 = vmatprep.subr.mxu0 0.0
    %1660 = vmatpush1.msra.mxu0 0.0
    %1661 = vmatprep.subr.mxu0 0.0
    %1662 = vmatpush1.msra.mxu0 0.0
    %1663 = vmatprep.subr.mxu0 0.0
    %1664 = vmatpush1.msra.mxu0 0.0
    %1665 = vmatprep.subr.mxu0 0.0
    %1666 = vmatpush1.msra.mxu0 0.0
    %1667 = vmatprep.subr.mxu0 0.0
    %1668 = vmatpush1.msra.mxu0 0.0
    %1669 = vmatprep.subr.mxu0 0.0
    %1670 = vmatpush1.msra.mxu0 0.0
    %1671 = vmatprep.subr.mxu0 0.0
    %1672 = vmatpush1.msra.mxu0 0.0
    %1673 = vmatprep.subr.mxu0 0.0
    %1674 = vmatpush1.msra.mxu0 0.0
    %1675 = vmatprep.subr.mxu0 0.0
    %1676 = vmatpush1.msra.mxu0 0.0
    %1677 = vmatprep.subr.mxu0 0.0
    %1678 = vmatpush1.msra.mxu0 0.0
    %1679 = vmatprep.subr.mxu0 0.0
    %1680 = vmatpush1.msra.mxu0 0.0
    %1681 = vmatprep.subr.mxu0 0.0
    %1682 = vmatpush1.msra.mxu0 0.0
    %1683 = vmatprep.subr.mxu0 0.0
    %1684 = vmatpush1.msra.mxu0 %v1647
    %1685 = vmatprep.subr.mxu0 0.0
    %1686 = vmatpush1.msra.mxu0 %v1646
    %1687 = vmatprep.subr.mxu0 0.0
    %1688 = vmatpush1.msra.mxu0 %v1645
    %1689 = vmatprep.subr.mxu0 0.0
    %1690 = vmatpush1.msra.mxu0 %v1644
    %1691 = vmatprep.subr.mxu0 0.0
    %1692 = vmatpush2.msra.mxu0 0.0
    %1693 = vmatprep.subr.mxu0 0.0
    %1694 = vmatpush2.msra.mxu0 0.0
    %1695 = vmatprep.subr.mxu0 0.0
    %1696 = vmatpush2.msra.mxu0 0.0
    %1697 = vmatprep.subr.mxu0 0.0
    %1698 = vmatpush2.msra.mxu0 0.0
    %1699 = vmatprep.subr.mxu0 0.0
    %1700 = vmatpush2.msra.mxu0 0.0
    %1701 = vmatprep.subr.mxu0 0.0
    %1702 = vmatpush2.msra.mxu0 0.0
    %1703 = vmatprep.subr.mxu0 0.0
    %1704 = vmatpush2.msra.mxu0 0.0
    %1705 = vmatprep.subr.mxu0 0.0
    %1706 = vmatpush2.msra.mxu0 0.0
    %1707 = vmatprep.subr.mxu0 0.0
    %1708 = vmatpush2.msra.mxu0 0.0
    %1709 = vmatprep.subr.mxu0 0.0
    %1710 = vmatpush2.msra.mxu0 0.0
    %1711 = vmatprep.subr.mxu0 0.0
    %1712 = vmatpush2.msra.mxu0 0.0
    %1713 = vmatprep.subr.mxu0 0.0
    %1714 = vmatpush2.msra.mxu0 0.0
    %1715 = vmatprep.subr.mxu0 0.0
    %1716 = vmatpush2.msra.mxu0 0.0
    %1717 = vmatprep.subr.mxu0 0.0
    %1718 = vmatpush2.msra.mxu0 0.0
    %1719 = vmatprep.subr.mxu0 0.0
    %1720 = vmatpush2.msra.mxu0 0.0
    %1721 = vmatprep.subr.mxu0 0.0
    %1722 = vmatpush2.msra.mxu0 0.0
    %1723 = vmatprep.mubr.f32.mxu0 0.0
    %1724 = vmatmul.mubr.f32.gmra.mxu0 %v1657
    %v1725 = vpop.f32.mrf.mxu0
    %v1726 = vadd.f32 %v1654, %v1725
    %v1727 = vpop.f32.mrf.mxu0
    %1728 = vdwg.mxu0
    %v1729 = vmax.f32 %v1726, 0.0
    %s1730 = scalar_lea.vmem %s41, 32
    %v1731 = vld [vmem:[%s1730] sm:$0xff]
    %v1732 = vld [vmem:[%s1730 + $0x8] sm:$0xff]
    %v1733 = vld [vmem:[%s1730 + $0x10] sm:$0xff]
    %v1734 = vld [vmem:[%s1730 + $0x18] sm:$0xff]
    %s1735 = scalar_lea.vmem [#allocation20], 1
    %v1736 = vld [vmem:[%s1735] sm:$0x1]
    %v1738 = vlaneseq
    %v1739 = vshrl.u32 %v1738, 7
    %v1740 = vsub.s32 0, %v1739
    %v1741 = vrot.slane %v1736, %v1740
    %v1744 = vsel %vm735, %v1729, 0
    %1746 = vmatprep.subr.mxu0 0.0
    %1747 = vmatpush1.msra.mxu0 0.0
    %1748 = vmatprep.subr.mxu0 0.0
    %1749 = vmatpush1.msra.mxu0 0.0
    %1750 = vmatprep.subr.mxu0 0.0
    %1751 = vmatpush1.msra.mxu0 0.0
    %1752 = vmatprep.subr.mxu0 0.0
    %1753 = vmatpush1.msra.mxu0 0.0
    %1754 = vmatprep.subr.mxu0 0.0
    %1755 = vmatpush1.msra.mxu0 0.0
    %1756 = vmatprep.subr.mxu0 0.0
    %1757 = vmatpush1.msra.mxu0 0.0
    %1758 = vmatprep.subr.mxu0 0.0
    %1759 = vmatpush1.msra.mxu0 0.0
    %1760 = vmatprep.subr.mxu0 0.0
    %1761 = vmatpush1.msra.mxu0 0.0
    %1762 = vmatprep.subr.mxu0 0.0
    %1763 = vmatpush1.msra.mxu0 0.0
    %1764 = vmatprep.subr.mxu0 0.0
    %1765 = vmatpush1.msra.mxu0 0.0
    %1766 = vmatprep.subr.mxu0 0.0
    %1767 = vmatpush1.msra.mxu0 0.0
    %1768 = vmatprep.subr.mxu0 0.0
    %1769 = vmatpush1.msra.mxu0 0.0
    %1770 = vmatprep.subr.mxu0 0.0
    %1771 = vmatpush1.msra.mxu0 %v1734
    %1772 = vmatprep.subr.mxu0 0.0
    %1773 = vmatpush1.msra.mxu0 %v1733
    %1774 = vmatprep.subr.mxu0 0.0
    %1775 = vmatpush1.msra.mxu0 %v1732
    %1776 = vmatprep.subr.mxu0 0.0
    %1777 = vmatpush1.msra.mxu0 %v1731
    %1778 = vmatprep.subr.mxu0 0.0
    %1779 = vmatpush2.msra.mxu0 0.0
    %1780 = vmatprep.subr.mxu0 0.0
    %1781 = vmatpush2.msra.mxu0 0.0
    %1782 = vmatprep.subr.mxu0 0.0
    %1783 = vmatpush2.msra.mxu0 0.0
    %1784 = vmatprep.subr.mxu0 0.0
    %1785 = vmatpush2.msra.mxu0 0.0
    %1786 = vmatprep.subr.mxu0 0.0
    %1787 = vmatpush2.msra.mxu0 0.0
    %1788 = vmatprep.subr.mxu0 0.0
    %1789 = vmatpush2.msra.mxu0 0.0
    %1790 = vmatprep.subr.mxu0 0.0
    %1791 = vmatpush2.msra.mxu0 0.0
    %1792 = vmatprep.subr.mxu0 0.0
    %1793 = vmatpush2.msra.mxu0 0.0
    %1794 = vmatprep.subr.mxu0 0.0
    %1795 = vmatpush2.msra.mxu0 0.0
    %1796 = vmatprep.subr.mxu0 0.0
    %1797 = vmatpush2.msra.mxu0 0.0
    %1798 = vmatprep.subr.mxu0 0.0
    %1799 = vmatpush2.msra.mxu0 0.0
    %1800 = vmatprep.subr.mxu0 0.0
    %1801 = vmatpush2.msra.mxu0 0.0
    %1802 = vmatprep.subr.mxu0 0.0
    %1803 = vmatpush2.msra.mxu0 0.0
    %1804 = vmatprep.subr.mxu0 0.0
    %1805 = vmatpush2.msra.mxu0 0.0
    %1806 = vmatprep.subr.mxu0 0.0
    %1807 = vmatpush2.msra.mxu0 0.0
    %1808 = vmatprep.subr.mxu0 0.0
    %1809 = vmatpush2.msra.mxu0 0.0
    %1810 = vmatprep.mubr.f32.mxu0 0.0
    %1811 = vmatmul.mubr.f32.gmra.mxu0 %v1744
    %v1812 = vpop.f32.mrf.mxu0
    %v1813 = vadd.f32 %v1741, %v1812
    %v1814 = vpop.f32.mrf.mxu0
    %1815 = vdwg.mxu0
    %v1816 = vadd.f32 %v1813, %v1495
    %1817 = vmatprep.subr.mxu0 0.0
    %1818 = vmatpush1.msra.mxu0 0.0
    %1819 = vmatprep.subr.mxu0 0.0
    %1820 = vmatpush1.msra.mxu0 0.0
    %1821 = vmatprep.subr.mxu0 0.0
    %1822 = vmatpush1.msra.mxu0 0.0
    %1823 = vmatprep.subr.mxu0 0.0
    %1824 = vmatpush1.msra.mxu0 0.0
    %1825 = vmatprep.subr.mxu0 0.0
    %1826 = vmatpush1.msra.mxu0 0.0
    %1827 = vmatprep.subr.mxu0 0.0
    %1828 = vmatpush1.msra.mxu0 0.0
    %1829 = vmatprep.subr.mxu0 0.0
    %1830 = vmatpush1.msra.mxu0 0.0
    %1831 = vmatprep.subr.mxu0 0.0
    %1832 = vmatpush1.msra.mxu0 0.0
    %1833 = vmatprep.subr.mxu0 0.0
    %1834 = vmatpush1.msra.mxu0 0.0
    %1835 = vmatprep.subr.mxu0 0.0
    %1836 = vmatpush1.msra.mxu0 0.0
    %1837 = vmatprep.subr.mxu0 0.0
    %1838 = vmatpush1.msra.mxu0 0.0
    %1839 = vmatprep.subr.mxu0 0.0
    %1840 = vmatpush1.msra.mxu0 0.0
    %1841 = vmatprep.subr.mxu0 0.0
    %1842 = vmatpush1.msra.mxu0 0.0
    %1843 = vmatprep.subr.mxu0 0.0
    %1844 = vmatpush1.msra.mxu0 0.0
    %1845 = vmatprep.subr.mxu0 0.0
    %1846 = vmatpush1.msra.mxu0 0.0
    %1847 = vmatprep.subr.mxu0 0.0
    %1848 = vmatpush1.msra.mxu0 %v1816
    %1849 = vmatprep.subr.mxu0 0.0
    %1850 = vmatpush2.msra.mxu0 0.0
    %1851 = vmatprep.subr.mxu0 0.0
    %1852 = vmatpush2.msra.mxu0 0.0
    %1853 = vmatprep.subr.mxu0 0.0
    %1854 = vmatpush2.msra.mxu0 0.0
    %1855 = vmatprep.subr.mxu0 0.0
    %1856 = vmatpush2.msra.mxu0 0.0
    %1857 = vmatprep.subr.mxu0 0.0
    %1858 = vmatpush2.msra.mxu0 0.0
    %1859 = vmatprep.subr.mxu0 0.0
    %1860 = vmatpush2.msra.mxu0 0.0
    %1861 = vmatprep.subr.mxu0 0.0
    %1862 = vmatpush2.msra.mxu0 0.0
    %1863 = vmatprep.subr.mxu0 0.0
    %1864 = vmatpush2.msra.mxu0 0.0
    %1865 = vmatprep.subr.mxu0 0.0
    %1866 = vmatpush2.msra.mxu0 0.0
    %1867 = vmatprep.subr.mxu0 0.0
    %1868 = vmatpush2.msra.mxu0 0.0
    %1869 = vmatprep.subr.mxu0 0.0
    %1870 = vmatpush2.msra.mxu0 0.0
    %1871 = vmatprep.subr.mxu0 0.0
    %1872 = vmatpush2.msra.mxu0 0.0
    %1873 = vmatprep.subr.mxu0 0.0
    %1874 = vmatpush2.msra.mxu0 0.0
    %1875 = vmatprep.subr.mxu0 0.0
    %1876 = vmatpush2.msra.mxu0 0.0
    %1877 = vmatprep.subr.mxu0 0.0
    %1878 = vmatpush2.msra.mxu0 0.0
    %1879 = vmatprep.subr.mxu0 0.0
    %1880 = vmatpush2.msra.mxu0 0.0
    %1881 = vmatprep.mubr.f32.mxu0 0.0
    %1882 = vmatmul.mubr.f32.gmra.mxu0 %v1170
    %v1883 = vpop.f32.mrf.mxu0
    %v1884 = vadd.f32 0.0, %v1883
    %v1885 = vpop.f32.mrf.mxu0
    %1886 = vmatprep.mubr.f32.mxu0 0.0
    %1887 = vmatmul.mubr.f32.gmra.mxu0 %v1173
    %v1888 = vpop.f32.mrf.mxu0
    %v1889 = vadd.f32 0.0, %v1888
    %v1890 = vpop.f32.mrf.mxu0
    %1891 = vdwg.mxu0
    %v1893 = vsel %vm1168, %v851, 0
    %v1896 = vsel %vm1168, %v852, 0
    %1898 = vmatprep.subr.mxu0 0.0
    %1899 = vmatpush1.msra.mxu0 0.0
    %1900 = vmatprep.subr.mxu0 0.0
    %1901 = vmatpush1.msra.mxu0 0.0
    %1902 = vmatprep.subr.mxu0 0.0
    %1903 = vmatpush1.msra.mxu0 0.0
    %1904 = vmatprep.subr.mxu0 0.0
    %1905 = vmatpush1.msra.mxu0 0.0
    %1906 = vmatprep.subr.mxu0 0.0
    %1907 = vmatpush1.msra.mxu0 0.0
    %1908 = vmatprep.subr.mxu0 0.0
    %1909 = vmatpush1.msra.mxu0 0.0
    %1910 = vmatprep.subr.mxu0 0.0
    %1911 = vmatpush1.msra.mxu0 0.0
    %1912 = vmatprep.subr.mxu0 0.0
    %1913 = vmatpush1.msra.mxu0 0.0
    %1914 = vmatprep.subr.mxu0 0.0
    %1915 = vmatpush1.msra.mxu0 0.0
    %1916 = vmatprep.subr.mxu0 0.0
    %1917 = vmatpush1.msra.mxu0 0.0
    %1918 = vmatprep.subr.mxu0 0.0
    %1919 = vmatpush1.msra.mxu0 0.0
    %1920 = vmatprep.subr.mxu0 0.0
    %1921 = vmatpush1.msra.mxu0 0.0
    %1922 = vmatprep.subr.mxu0 0.0
    %1923 = vmatpush1.msra.mxu0 0.0
    %1924 = vmatprep.subr.mxu0 0.0
    %1925 = vmatpush1.msra.mxu0 0.0
    %1926 = vmatprep.subr.mxu0 0.0
    %1927 = vmatpush1.msra.mxu0 0.0
    %1928 = vmatprep.subr.mxu0 0.0
    %1929 = vmatpush1.msra.mxu0 %v1816
    %1930 = vmatprep.subr.mxu0 0.0
    %1931 = vmatpush2.msra.mxu0 0.0
    %1932 = vmatprep.subr.mxu0 0.0
    %1933 = vmatpush2.msra.mxu0 0.0
    %1934 = vmatprep.subr.mxu0 0.0
    %1935 = vmatpush2.msra.mxu0 0.0
    %1936 = vmatprep.subr.mxu0 0.0
    %1937 = vmatpush2.msra.mxu0 0.0
    %1938 = vmatprep.subr.mxu0 0.0
    %1939 = vmatpush2.msra.mxu0 0.0
    %1940 = vmatprep.subr.mxu0 0.0
    %1941 = vmatpush2.msra.mxu0 0.0
    %1942 = vmatprep.subr.mxu0 0.0
    %1943 = vmatpush2.msra.mxu0 0.0
    %1944 = vmatprep.subr.mxu0 0.0
    %1945 = vmatpush2.msra.mxu0 0.0
    %1946 = vmatprep.subr.mxu0 0.0
    %1947 = vmatpush2.msra.mxu0 0.0
    %1948 = vmatprep.subr.mxu0 0.0
    %1949 = vmatpush2.msra.mxu0 0.0
    %1950 = vmatprep.subr.mxu0 0.0
    %1951 = vmatpush2.msra.mxu0 0.0
    %1952 = vmatprep.subr.mxu0 0.0
    %1953 = vmatpush2.msra.mxu0 0.0
    %1954 = vmatprep.subr.mxu0 0.0
    %1955 = vmatpush2.msra.mxu0 0.0
    %1956 = vmatprep.subr.mxu0 0.0
    %1957 = vmatpush2.msra.mxu0 0.0
    %1958 = vmatprep.subr.mxu0 0.0
    %1959 = vmatpush2.msra.mxu0 0.0
    %1960 = vmatprep.subr.mxu0 0.0
    %1961 = vmatpush2.msra.mxu0 0.0
    %1962 = vmatprep.mubr.f32.mxu0 0.0
    %1963 = vmatmul.mubr.f32.gmra.mxu0 %v1893
    %v1964 = vpop.f32.mrf.mxu0
    %v1965 = vadd.f32 0.0, %v1964
    %v1966 = vpop.f32.mrf.mxu0
    %1967 = vmatprep.mubr.f32.mxu0 0.0
    %1968 = vmatmul.mubr.f32.gmra.mxu0 %v1896
    %v1969 = vpop.f32.mrf.mxu0
    %v1970 = vadd.f32 0.0, %v1969
    %v1971 = vpop.f32.mrf.mxu0
    %1972 = vdwg.mxu0
    %v1973 = vmul.f32 %v1884, %v1965
    %v1974 = vmul.f32 %v1889, %v1970
    %v1975 = vld [vmem:[%s45] sm:$0xff]
    %v1976 = vld [vmem:[%s45 + $0x8] sm:$0xff]
    %v1977 = vld [vmem:[%s45 + $0x10] sm:$0xff]
    %v1978 = vld [vmem:[%s45 + $0x18] sm:$0xff]
    %v1979 = vld [vmem:[#allocation21] sm:$0xff]
    %v1980 = vld [vmem:[#allocation21 + $0x8] sm:$0xff]
    %v1981 = vld [vmem:[#allocation21 + $0x10] sm:$0xff]
    %v1982 = vld [vmem:[#allocation21 + $0x18] sm:$0xff]
    %v1984 = vsel %vm735, %v1165, 0
    %v1987 = vsel %vm735, %v1166, 0
    %1989 = vmatprep.subr.mxu0 0.0
    %1990 = vmatpush1.msra.mxu0 0.0
    %1991 = vmatprep.subr.mxu0 0.0
    %1992 = vmatpush1.msra.mxu0 0.0
    %1993 = vmatprep.subr.mxu0 0.0
    %1994 = vmatpush1.msra.mxu0 0.0
    %1995 = vmatprep.subr.mxu0 0.0
    %1996 = vmatpush1.msra.mxu0 0.0
    %1997 = vmatprep.subr.mxu0 0.0
    %1998 = vmatpush1.msra.mxu0 0.0
    %1999 = vmatprep.subr.mxu0 0.0
    %2000 = vmatpush1.msra.mxu0 0.0
    %2001 = vmatprep.subr.mxu0 0.0
    %2002 = vmatpush1.msra.mxu0 0.0
    %2003 = vmatprep.subr.mxu0 0.0
    %2004 = vmatpush1.msra.mxu0 0.0
    %2005 = vmatprep.subr.mxu0 0.0
    %2006 = vmatpush1.msra.mxu0 0.0
    %2007 = vmatprep.subr.mxu0 0.0
    %2008 = vmatpush1.msra.mxu0 0.0
    %2009 = vmatprep.subr.mxu0 0.0
    %2010 = vmatpush1.msra.mxu0 0.0
    %2011 = vmatprep.subr.mxu0 0.0
    %2012 = vmatpush1.msra.mxu0 0.0
    %2013 = vmatprep.subr.mxu0 0.0
    %2014 = vmatpush1.msra.mxu0 %v1982
    %2015 = vmatprep.subr.mxu0 0.0
    %2016 = vmatpush1.msra.mxu0 %v1981
    %2017 = vmatprep.subr.mxu0 0.0
    %2018 = vmatpush1.msra.mxu0 %v1980
    %2019 = vmatprep.subr.mxu0 0.0
    %2020 = vmatpush1.msra.mxu0 %v1979
    %2021 = vmatprep.subr.mxu0 0.0
    %2022 = vmatpush2.msra.mxu0 0.0
    %2023 = vmatprep.subr.mxu0 0.0
    %2024 = vmatpush2.msra.mxu0 0.0
    %2025 = vmatprep.subr.mxu0 0.0
    %2026 = vmatpush2.msra.mxu0 0.0
    %2027 = vmatprep.subr.mxu0 0.0
    %2028 = vmatpush2.msra.mxu0 0.0
    %2029 = vmatprep.subr.mxu0 0.0
    %2030 = vmatpush2.msra.mxu0 0.0
    %2031 = vmatprep.subr.mxu0 0.0
    %2032 = vmatpush2.msra.mxu0 0.0
    %2033 = vmatprep.subr.mxu0 0.0
    %2034 = vmatpush2.msra.mxu0 0.0
    %2035 = vmatprep.subr.mxu0 0.0
    %2036 = vmatpush2.msra.mxu0 0.0
    %2037 = vmatprep.subr.mxu0 0.0
    %2038 = vmatpush2.msra.mxu0 0.0
    %2039 = vmatprep.subr.mxu0 0.0
    %2040 = vmatpush2.msra.mxu0 0.0
    %2041 = vmatprep.subr.mxu0 0.0
    %2042 = vmatpush2.msra.mxu0 0.0
    %2043 = vmatprep.subr.mxu0 0.0
    %2044 = vmatpush2.msra.mxu0 0.0
    %2045 = vmatprep.subr.mxu0 0.0
    %2046 = vmatpush2.msra.mxu0 0.0
    %2047 = vmatprep.subr.mxu0 0.0
    %2048 = vmatpush2.msra.mxu0 0.0
    %2049 = vmatprep.subr.mxu0 0.0
    %2050 = vmatpush2.msra.mxu0 0.0
    %2051 = vmatprep.subr.mxu0 0.0
    %2052 = vmatpush2.msra.mxu0 0.0
    %2053 = vmatprep.mubr.f32.mxu0 0.0
    %2054 = vmatmul.mubr.f32.gmra.mxu0 %v1984
    %v2055 = vpop.f32.mrf.mxu0
    %v2056 = vadd.f32 0.0, %v2055
    %v2057 = vpop.f32.mrf.mxu0
    %2058 = vmatprep.mubr.f32.mxu0 0.0
    %2059 = vmatmul.mubr.f32.gmra.mxu0 %v1987
    %v2060 = vpop.f32.mrf.mxu0
    %v2061 = vadd.f32 0.0, %v2060
    %v2062 = vpop.f32.mrf.mxu0
    %2063 = vdwg.mxu0
    %v2065 = vsel %vm735, %v1973, 0
    %v2068 = vsel %vm735, %v1974, 0
    %2070 = vmatprep.subr.mxu0 0.0
    %2071 = vmatpush1.msra.mxu0 0.0
    %2072 = vmatprep.subr.mxu0 0.0
    %2073 = vmatpush1.msra.mxu0 0.0
    %2074 = vmatprep.subr.mxu0 0.0
    %2075 = vmatpush1.msra.mxu0 0.0
    %2076 = vmatprep.subr.mxu0 0.0
    %2077 = vmatpush1.msra.mxu0 0.0
    %2078 = vmatprep.subr.mxu0 0.0
    %2079 = vmatpush1.msra.mxu0 0.0
    %2080 = vmatprep.subr.mxu0 0.0
    %2081 = vmatpush1.msra.mxu0 0.0
    %2082 = vmatprep.subr.mxu0 0.0
    %2083 = vmatpush1.msra.mxu0 0.0
    %2084 = vmatprep.subr.mxu0 0.0
    %2085 = vmatpush1.msra.mxu0 0.0
    %2086 = vmatprep.subr.mxu0 0.0
    %2087 = vmatpush1.msra.mxu0 0.0
    %2088 = vmatprep.subr.mxu0 0.0
    %2089 = vmatpush1.msra.mxu0 0.0
    %2090 = vmatprep.subr.mxu0 0.0
    %2091 = vmatpush1.msra.mxu0 0.0
    %2092 = vmatprep.subr.mxu0 0.0
    %2093 = vmatpush1.msra.mxu0 0.0
    %2094 = vmatprep.subr.mxu0 0.0
    %2095 = vmatpush1.msra.mxu0 %v1978
    %2096 = vmatprep.subr.mxu0 0.0
    %2097 = vmatpush1.msra.mxu0 %v1977
    %2098 = vmatprep.subr.mxu0 0.0
    %2099 = vmatpush1.msra.mxu0 %v1976
    %2100 = vmatprep.subr.mxu0 0.0
    %2101 = vmatpush1.msra.mxu0 %v1975
    %2102 = vmatprep.subr.mxu0 0.0
    %2103 = vmatpush2.msra.mxu0 0.0
    %2104 = vmatprep.subr.mxu0 0.0
    %2105 = vmatpush2.msra.mxu0 0.0
    %2106 = vmatprep.subr.mxu0 0.0
    %2107 = vmatpush2.msra.mxu0 0.0
    %2108 = vmatprep.subr.mxu0 0.0
    %2109 = vmatpush2.msra.mxu0 0.0
    %2110 = vmatprep.subr.mxu0 0.0
    %2111 = vmatpush2.msra.mxu0 0.0
    %2112 = vmatprep.subr.mxu0 0.0
    %2113 = vmatpush2.msra.mxu0 0.0
    %2114 = vmatprep.subr.mxu0 0.0
    %2115 = vmatpush2.msra.mxu0 0.0
    %2116 = vmatprep.subr.mxu0 0.0
    %2117 = vmatpush2.msra.mxu0 0.0
    %2118 = vmatprep.subr.mxu0 0.0
    %2119 = vmatpush2.msra.mxu0 0.0
    %2120 = vmatprep.subr.mxu0 0.0
    %2121 = vmatpush2.msra.mxu0 0.0
    %2122 = vmatprep.subr.mxu0 0.0
    %2123 = vmatpush2.msra.mxu0 0.0
    %2124 = vmatprep.subr.mxu0 0.0
    %2125 = vmatpush2.msra.mxu0 0.0
    %2126 = vmatprep.subr.mxu0 0.0
    %2127 = vmatpush2.msra.mxu0 0.0
    %2128 = vmatprep.subr.mxu0 0.0
    %2129 = vmatpush2.msra.mxu0 0.0
    %2130 = vmatprep.subr.mxu0 0.0
    %2131 = vmatpush2.msra.mxu0 0.0
    %2132 = vmatprep.subr.mxu0 0.0
    %2133 = vmatpush2.msra.mxu0 0.0
    %2134 = vmatprep.mubr.f32.mxu0 0.0
    %2135 = vmatmul.mubr.f32.gmra.mxu0 %v2065
    %v2136 = vpop.f32.mrf.mxu0
    %v2137 = vadd.f32 %v2056, %v2136
    %v2138 = vpop.f32.mrf.mxu0
    %2139 = vmatprep.mubr.f32.mxu0 0.0
    %2140 = vmatmul.mubr.f32.gmra.mxu0 %v2068
    %v2141 = vpop.f32.mrf.mxu0
    %v2142 = vadd.f32 %v2061, %v2141
    %v2143 = vpop.f32.mrf.mxu0
    %2144 = vdwg.mxu0
    %v2145 = vld [vmem:[%s49] sm:$0x1]
    %v2147 = vlaneseq
    %v2148 = vshrl.u32 %v2147, 7
    %v2149 = vsub.s32 0, %v2148
    %v2150 = vrot.slane %v2145, %v2149
    %v2152 = vadd.f32 %v2137, %v2150
    %v2153 = vadd.f32 %v2142, %v2150
    %v2154 = vmax.f32 %v2152, 0.0
    %v2155 = vmax.f32 %v2153, 0.0
    %v2156 = vld [vmem:[%s51] sm:$0xff]
    %v2157 = vld [vmem:[%s51 + $0x8] sm:$0xff]
    %v2158 = vld [vmem:[%s51 + $0x10] sm:$0xff]
    %v2159 = vld [vmem:[%s51 + $0x18] sm:$0xff]
    %v2160 = vld [vmem:[%s53] sm:$0x1]
    %v2162 = vlaneseq
    %v2163 = vshrl.u32 %v2162, 7
    %v2164 = vsub.s32 0, %v2163
    %v2165 = vrot.slane %v2160, %v2164
    %v2168 = vsel %vm735, %v2154, 0
    %v2171 = vsel %vm735, %v2155, 0
    %2173 = vmatprep.subr.mxu0 0.0
    %2174 = vmatpush1.msra.mxu0 0.0
    %2175 = vmatprep.subr.mxu0 0.0
    %2176 = vmatpush1.msra.mxu0 0.0
    %2177 = vmatprep.subr.mxu0 0.0
    %2178 = vmatpush1.msra.mxu0 0.0
    %2179 = vmatprep.subr.mxu0 0.0
    %2180 = vmatpush1.msra.mxu0 0.0
    %2181 = vmatprep.subr.mxu0 0.0
    %2182 = vmatpush1.msra.mxu0 0.0
    %2183 = vmatprep.subr.mxu0 0.0
    %2184 = vmatpush1.msra.mxu0 0.0
    %2185 = vmatprep.subr.mxu0 0.0
    %2186 = vmatpush1.msra.mxu0 0.0
    %2187 = vmatprep.subr.mxu0 0.0
    %2188 = vmatpush1.msra.mxu0 0.0
    %2189 = vmatprep.subr.mxu0 0.0
    %2190 = vmatpush1.msra.mxu0 0.0
    %2191 = vmatprep.subr.mxu0 0.0
    %2192 = vmatpush1.msra.mxu0 0.0
    %2193 = vmatprep.subr.mxu0 0.0
    %2194 = vmatpush1.msra.mxu0 0.0
    %2195 = vmatprep.subr.mxu0 0.0
    %2196 = vmatpush1.msra.mxu0 0.0
    %2197 = vmatprep.subr.mxu0 0.0
    %2198 = vmatpush1.msra.mxu0 %v2159
    %2199 = vmatprep.subr.mxu0 0.0
    %2200 = vmatpush1.msra.mxu0 %v2158
    %2201 = vmatprep.subr.mxu0 0.0
    %2202 = vmatpush1.msra.mxu0 %v2157
    %2203 = vmatprep.subr.mxu0 0.0
    %2204 = vmatpush1.msra.mxu0 %v2156
    %2205 = vmatprep.subr.mxu0 0.0
    %2206 = vmatpush2.msra.mxu0 0.0
    %2207 = vmatprep.subr.mxu0 0.0
    %2208 = vmatpush2.msra.mxu0 0.0
    %2209 = vmatprep.subr.mxu0 0.0
    %2210 = vmatpush2.msra.mxu0 0.0
    %2211 = vmatprep.subr.mxu0 0.0
    %2212 = vmatpush2.msra.mxu0 0.0
    %2213 = vmatprep.subr.mxu0 0.0
    %2214 = vmatpush2.msra.mxu0 0.0
    %2215 = vmatprep.subr.mxu0 0.0
    %2216 = vmatpush2.msra.mxu0 0.0
    %2217 = vmatprep.subr.mxu0 0.0
    %2218 = vmatpush2.msra.mxu0 0.0
    %2219 = vmatprep.subr.mxu0 0.0
    %2220 = vmatpush2.msra.mxu0 0.0
    %2221 = vmatprep.subr.mxu0 0.0
    %2222 = vmatpush2.msra.mxu0 0.0
    %2223 = vmatprep.subr.mxu0 0.0
    %2224 = vmatpush2.msra.mxu0 0.0
    %2225 = vmatprep.subr.mxu0 0.0
    %2226 = vmatpush2.msra.mxu0 0.0
    %2227 = vmatprep.subr.mxu0 0.0
    %2228 = vmatpush2.msra.mxu0 0.0
    %2229 = vmatprep.subr.mxu0 0.0
    %2230 = vmatpush2.msra.mxu0 0.0
    %2231 = vmatprep.subr.mxu0 0.0
    %2232 = vmatpush2.msra.mxu0 0.0
    %2233 = vmatprep.subr.mxu0 0.0
    %2234 = vmatpush2.msra.mxu0 0.0
    %2235 = vmatprep.subr.mxu0 0.0
    %2236 = vmatpush2.msra.mxu0 0.0
    %2237 = vmatprep.mubr.f32.mxu0 0.0
    %2238 = vmatmul.mubr.f32.gmra.mxu0 %v2168
    %v2239 = vpop.f32.mrf.mxu0
    %v2240 = vadd.f32 %v2165, %v2239
    %v2241 = vpop.f32.mrf.mxu0
    %2242 = vmatprep.mubr.f32.mxu0 0.0
    %2243 = vmatmul.mubr.f32.gmra.mxu0 %v2171
    %v2244 = vpop.f32.mrf.mxu0
    %v2245 = vadd.f32 %v2165, %v2244
    %v2246 = vpop.f32.mrf.mxu0
    %2247 = vdwg.mxu0
    %v2248 = vmax.f32 %v2240, 0.0
    %v2249 = vmax.f32 %v2245, 0.0
    %v2250 = vld [vmem:[%s55] sm:$0xff]
    %v2251 = vld [vmem:[%s55 + $0x8] sm:$0xff]
    %v2252 = vld [vmem:[#allocation3] sm:$0x1]
    %v2254 = vlaneseq
    %v2255 = vshrl.u32 %v2254, 7
    %v2256 = vsub.s32 0, %v2255
    %v2257 = vrot.slane %v2252, %v2256
    %v2260 = vsel %vm569, %v2248, 0
    %v2263 = vsel %vm569, %v2249, 0
    %2265 = vmatprep.subr.mxu0 0.0
    %2266 = vmatpush1.msra.mxu0 0.0
    %2267 = vmatprep.subr.mxu0 0.0
    %2268 = vmatpush1.msra.mxu0 0.0
    %2269 = vmatprep.subr.mxu0 0.0
    %2270 = vmatpush1.msra.mxu0 0.0
    %2271 = vmatprep.subr.mxu0 0.0
    %2272 = vmatpush1.msra.mxu0 0.0
    %2273 = vmatprep.subr.mxu0 0.0
    %2274 = vmatpush1.msra.mxu0 0.0
    %2275 = vmatprep.subr.mxu0 0.0
    %2276 = vmatpush1.msra.mxu0 0.0
    %2277 = vmatprep.subr.mxu0 0.0
    %2278 = vmatpush1.msra.mxu0 0.0
    %2279 = vmatprep.subr.mxu0 0.0
    %2280 = vmatpush1.msra.mxu0 0.0
    %2281 = vmatprep.subr.mxu0 0.0
    %2282 = vmatpush1.msra.mxu0 0.0
    %2283 = vmatprep.subr.mxu0 0.0
    %2284 = vmatpush1.msra.mxu0 0.0
    %2285 = vmatprep.subr.mxu0 0.0
    %2286 = vmatpush1.msra.mxu0 0.0
    %2287 = vmatprep.subr.mxu0 0.0
    %2288 = vmatpush1.msra.mxu0 0.0
    %2289 = vmatprep.subr.mxu0 0.0
    %2290 = vmatpush1.msra.mxu0 0.0
    %2291 = vmatprep.subr.mxu0 0.0
    %2292 = vmatpush1.msra.mxu0 0.0
    %2293 = vmatprep.subr.mxu0 0.0
    %2294 = vmatpush1.msra.mxu0 %v2251
    %2295 = vmatprep.subr.mxu0 0.0
    %2296 = vmatpush1.msra.mxu0 %v2250
    %2297 = vmatprep.subr.mxu0 0.0
    %2298 = vmatpush2.msra.mxu0 0.0
    %2299 = vmatprep.subr.mxu0 0.0
    %2300 = vmatpush2.msra.mxu0 0.0
    %2301 = vmatprep.subr.mxu0 0.0
    %2302 = vmatpush2.msra.mxu0 0.0
    %2303 = vmatprep.subr.mxu0 0.0
    %2304 = vmatpush2.msra.mxu0 0.0
    %2305 = vmatprep.subr.mxu0 0.0
    %2306 = vmatpush2.msra.mxu0 0.0
    %2307 = vmatprep.subr.mxu0 0.0
    %2308 = vmatpush2.msra.mxu0 0.0
    %2309 = vmatprep.subr.mxu0 0.0
    %2310 = vmatpush2.msra.mxu0 0.0
    %2311 = vmatprep.subr.mxu0 0.0
    %2312 = vmatpush2.msra.mxu0 0.0
    %2313 = vmatprep.subr.mxu0 0.0
    %2314 = vmatpush2.msra.mxu0 0.0
    %2315 = vmatprep.subr.mxu0 0.0
    %2316 = vmatpush2.msra.mxu0 0.0
    %2317 = vmatprep.subr.mxu0 0.0
    %2318 = vmatpush2.msra.mxu0 0.0
    %2319 = vmatprep.subr.mxu0 0.0
    %2320 = vmatpush2.msra.mxu0 0.0
    %2321 = vmatprep.subr.mxu0 0.0
    %2322 = vmatpush2.msra.mxu0 0.0
    %2323 = vmatprep.subr.mxu0 0.0
    %2324 = vmatpush2.msra.mxu0 0.0
    %2325 = vmatprep.subr.mxu0 0.0
    %2326 = vmatpush2.msra.mxu0 0.0
    %2327 = vmatprep.subr.mxu0 0.0
    %2328 = vmatpush2.msra.mxu0 0.0
    %2329 = vmatprep.mubr.f32.mxu0 0.0
    %2330 = vmatmul.mubr.f32.gmra.mxu0 %v2260
    %v2331 = vpop.f32.mrf.mxu0
    %v2332 = vadd.f32 %v2257, %v2331
    %v2333 = vpop.f32.mrf.mxu0
    %2334 = vmatprep.mubr.f32.mxu0 0.0
    %2335 = vmatmul.mubr.f32.gmra.mxu0 %v2263
    %v2336 = vpop.f32.mrf.mxu0
    %v2337 = vadd.f32 %v2257, %v2336
    %v2338 = vpop.f32.mrf.mxu0
    %2339 = vdwg.mxu0
    %v2341 = vsel %vm1072, %v822, 0
    %2343 = vmatprep.subr.mxu0 0.0
    %2344 = vmatpush1.msra.mxu0 0.0
    %2345 = vmatprep.subr.mxu0 0.0
    %2346 = vmatpush1.msra.mxu0 0.0
    %2347 = vmatprep.subr.mxu0 0.0
    %2348 = vmatpush1.msra.mxu0 0.0
    %2349 = vmatprep.subr.mxu0 0.0
    %2350 = vmatpush1.msra.mxu0 0.0
    %2351 = vmatprep.subr.mxu0 0.0
    %2352 = vmatpush1.msra.mxu0 0.0
    %2353 = vmatprep.subr.mxu0 0.0
    %2354 = vmatpush1.msra.mxu0 0.0
    %2355 = vmatprep.subr.mxu0 0.0
    %2356 = vmatpush1.msra.mxu0 0.0
    %2357 = vmatprep.subr.mxu0 0.0
    %2358 = vmatpush1.msra.mxu0 0.0
    %2359 = vmatprep.subr.mxu0 0.0
    %2360 = vmatpush1.msra.mxu0 0.0
    %2361 = vmatprep.subr.mxu0 0.0
    %2362 = vmatpush1.msra.mxu0 0.0
    %2363 = vmatprep.subr.mxu0 0.0
    %2364 = vmatpush1.msra.mxu0 0.0
    %2365 = vmatprep.subr.mxu0 0.0
    %2366 = vmatpush1.msra.mxu0 0.0
    %2367 = vmatprep.subr.mxu0 0.0
    %2368 = vmatpush1.msra.mxu0 0.0
    %2369 = vmatprep.subr.mxu0 0.0
    %2370 = vmatpush1.msra.mxu0 0.0
    %2371 = vmatprep.subr.mxu0 0.0
    %2372 = vmatpush1.msra.mxu0 0.0
    %2373 = vmatprep.subr.mxu0 0.0
    %2374 = vmatpush1.msra.mxu0 %v2341
    %2375 = vmatprep.subr.mxu0 0.0
    %2376 = vmatpush2.msra.mxu0 0.0
    %2377 = vmatprep.subr.mxu0 0.0
    %2378 = vmatpush2.msra.mxu0 0.0
    %2379 = vmatprep.subr.mxu0 0.0
    %2380 = vmatpush2.msra.mxu0 0.0
    %2381 = vmatprep.subr.mxu0 0.0
    %2382 = vmatpush2.msra.mxu0 0.0
    %2383 = vmatprep.subr.mxu0 0.0
    %2384 = vmatpush2.msra.mxu0 0.0
    %2385 = vmatprep.subr.mxu0 0.0
    %2386 = vmatpush2.msra.mxu0 0.0
    %2387 = vmatprep.subr.mxu0 0.0
    %2388 = vmatpush2.msra.mxu0 0.0
    %2389 = vmatprep.subr.mxu0 0.0
    %2390 = vmatpush2.msra.mxu0 0.0
    %2391 = vmatprep.subr.mxu0 0.0
    %2392 = vmatpush2.msra.mxu0 0.0
    %2393 = vmatprep.subr.mxu0 0.0
    %2394 = vmatpush2.msra.mxu0 0.0
    %2395 = vmatprep.subr.mxu0 0.0
    %2396 = vmatpush2.msra.mxu0 0.0
    %2397 = vmatprep.subr.mxu0 0.0
    %2398 = vmatpush2.msra.mxu0 0.0
    %2399 = vmatprep.subr.mxu0 0.0
    %2400 = vmatpush2.msra.mxu0 0.0
    %2401 = vmatprep.subr.mxu0 0.0
    %2402 = vmatpush2.msra.mxu0 0.0
    %2403 = vmatprep.subr.mxu0 0.0
    %2404 = vmatpush2.msra.mxu0 0.0
    %2405 = vmatprep.subr.mxu0 0.0
    %2406 = vmatpush2.msra.mxu0 0.0
    %2407 = vmatprep.mubr.f32.mxu0 0.0
    %2408 = vmatmul.mubr.f32.gmra.mxu0 %v1067
    %v2409 = vpop.f32.mrf.mxu0
    %v2410 = vadd.f32 0.0, %v2409
    %v2411 = vpop.f32.mrf.mxu0
    %2412 = vmatprep.mubr.f32.mxu0 0.0
    %2413 = vmatmul.mubr.f32.gmra.mxu0 %v1070
    %v2414 = vpop.f32.mrf.mxu0
    %v2415 = vadd.f32 0.0, %v2414
    %v2416 = vpop.f32.mrf.mxu0
    %2417 = vdwg.mxu0
    %v2418 = vrcp.pop %v2410
    %v2419 = vmul.f32 %v2332, %v2418
    %v2420 = vrcp.pop %v2415
    %v2421 = vmul.f32 %v2337, %v2420
    %2422 = vst.msk [vmem:[%s59] sm:$0xff] %vm279, %v2419
    %2423 = vst.msk [vmem:[%s59 + $0x8] sm:$0xff] %vm279, %v2421
    // Predicated region
    $region166: #{tpu_custom_call.1} parent=1 // pred_check
      _
    $region167: #{tpu_custom_call.1} parent=1 // pred_check_branch
      %2425 = sbr.rel (0) target = $region169
    $region168: #{tpu_custom_call.1} parent=1 // pred_region
      _
    $region169: #{tpu_custom_call.1} parent=1 // pred_fallthru
      _
    // Predicated region
    $region170: #{tpu_custom_call.1} parent=1 // pred_check
      _
    $region171: #{tpu_custom_call.1} parent=1 // pred_check_branch
      %2427 = sbr.rel (0) target = $region173
    $region172: #{tpu_custom_call.1} parent=1 // pred_region
      _
    $region173: #{tpu_custom_call.1} parent=1 // pred_fallthru
      _
    %2428 = vsyncpa [#allocation5], 1
    %2429 = vsyncpa [#allocation7], 1
    %2430 = vsyncpa [#allocation10], 1
    %2431 = vsyncpa [#allocation13], 1
    %2432 = vsyncpa [#allocation16], 1
    %2433 = vsyncpa [#allocation19], 1
    %2434 = vsyncpa [#allocation22], 1

</llo_original>
